<compile_context>
chip_gen: v7x
topology: tpu7x:2x2x1
jax: 0.10.0
libtpu: 0.0.40
codegen_flags: <defaults>
</compile_context>

<pallas_src>
import math

import jax
import jax.numpy as jnp
from jax.experimental import pallas as pl
from jax.experimental.pallas import tpu as pltpu


def _make_mhsa_kernel(heads, s_h):
    bf16 = jnp.bfloat16
    f32 = jnp.float32

    def kernel(q_ref, k_ref, v_ref,
               wq_ref, bq_ref, wk_ref, bk_ref, wv_ref, bv_ref,
               wo_ref, bo_ref,
               o_ref,
               kproj_ref, vproj_ref):
        i = pl.program_id(1)

        # --- K/V projection hoisted: once per batch element (first q-tile),
        # all heads at once (N = d_model -> full MXU), result kept in bf16
        # VMEM scratch and reused by every q-tile of this batch element. ---
        @pl.when(i == 0)
        def _project_kv():
            kx = k_ref[0].astype(bf16)                                    # (Lk, D)
            vx = v_ref[0].astype(bf16)                                    # (Lv, D)
            kproj_ref[...] = (jnp.dot(kx, wk_ref[...],
                                      preferred_element_type=f32)
                              + bk_ref[...]).astype(bf16)
            vproj_ref[...] = (jnp.dot(vx, wv_ref[...],
                                      preferred_element_type=f32)
                              + bv_ref[...]).astype(bf16)

        # --- Q projection for this tile, all heads at once; 1/sqrt(d_k) is
        # already folded into Wq/bq by the wrapper. ---
        qx = q_ref[0].astype(bf16)                                        # (tq, D)
        qp = (jnp.dot(qx, wq_ref[...], preferred_element_type=f32)
              + bq_ref[...]).astype(bf16)                                 # (tq, D)

        # --- Per-head attention, heads unrolled in-kernel (static loop).
        # Output linear accumulated in f32: concat @ Wo^T == sum_h ctx_h@Wo_h.
        acc = jnp.zeros(qp.shape, dtype=f32)                              # (tq, D)
        for h in range(heads):
            lo = h * s_h
            hi = lo + s_h
            qh = qp[:, lo:hi]                                             # (tq, s_h)
            kh = kproj_ref[:, lo:hi]                                      # (Lk, s_h)
            vh = vproj_ref[:, lo:hi]                                      # (Lv, s_h)

            # scores = qh @ kh^T via NT dot_general (no explicit transpose).
            scores = jax.lax.dot_general(
                qh, kh, (((1,), (1,)), ((), ())),
                preferred_element_type=f32)                               # (tq, Lk)

            # Numerically-stable softmax in f32; divide -> EUP reciprocal.
            m = jnp.max(scores, axis=-1, keepdims=True)
            e = jnp.exp(scores - m)
            inv = pl.reciprocal(jnp.sum(e, axis=-1, keepdims=True), approx=True)
            att = (e * inv).astype(bf16)                                  # (tq, Lk)

            ctx = jnp.dot(att, vh, preferred_element_type=f32).astype(bf16)
            acc = acc + jnp.dot(ctx, wo_ref[h], preferred_element_type=f32)

        o_ref[0] = (acc + bo_ref[...]).astype(o_ref.dtype)

    return kernel


def multi_head_self_attention(q, k, v, params, heads):
    """q: (B, Lq, D), k: (B, Lk, D), v: (B, Lv, D) float32.
    Returns (B, Lq, 1, D) float32 (matches the PyTorch view/transpose chain)."""
    wq, bq, wk, bk, wv, bv, wo, bo = params
    B, Lq, D = q.shape
    Lk = k.shape[1]
    Lv = v.shape[1]
    assert D % heads == 0
    assert Lk == Lv
    s_h = D // heads
    scale = 1.0 / math.sqrt(float(s_h))
    bf16 = jnp.bfloat16
    f32 = jnp.float32

    # nn.Linear does y = x @ W^T + b.  Pre-transpose once, cast to bf16, and
    # fold the softmax scale into Wq/bq so the kernel never transposes a
    # weight or rescales the (tq, Lk) score tensor.
    wq_t = (wq.T * scale).astype(bf16)                    # (D, D)
    wk_t = wk.T.astype(bf16)                              # (D, D)
    wv_t = wv.T.astype(bf16)                              # (D, D)
    wo_h = wo.T.reshape(heads, s_h, D).astype(bf16)       # Wo^T rows grouped per head
    bq_r = (bq * scale).reshape(1, D).astype(f32)
    bk_r = bk.reshape(1, D).astype(f32)
    bv_r = bv.reshape(1, D).astype(f32)
    bo_r = bo.reshape(1, D).astype(f32)

    # q-tile: whole sequence when short; 256-row tiles otherwise, padding Lq
    # up so every tile is full (padded query rows are sliced off afterwards).
    if Lq <= 256:
        tq, Lq_pad, q_in = Lq, Lq, q
    else:
        tq = 256
        Lq_pad = int(pl.cdiv(Lq, tq)) * tq
        q_in = jnp.pad(q, ((0, 0), (0, Lq_pad - Lq), (0, 0)))

    grid = (B, Lq_pad // tq)
    kernel = _make_mhsa_kernel(heads, s_h)

    out = pl.pallas_call(
        kernel,
        out_shape=jax.ShapeDtypeStruct((B, Lq_pad, D), jnp.float32),
        grid=grid,
        in_specs=[
            pl.BlockSpec((1, tq, D), lambda b, i: (b, i, 0)),       # q tile (f32)
            pl.BlockSpec((1, Lk, D), lambda b, i: (b, 0, 0)),       # k rows (invariant over i)
            pl.BlockSpec((1, Lv, D), lambda b, i: (b, 0, 0)),       # v rows (invariant over i)
            pl.BlockSpec((D, D), lambda b, i: (0, 0)),              # Wq^T * scale (resident)
            pl.BlockSpec((1, D), lambda b, i: (0, 0)),              # bq * scale
            pl.BlockSpec((D, D), lambda b, i: (0, 0)),              # Wk^T
            pl.BlockSpec((1, D), lambda b, i: (0, 0)),              # bk
            pl.BlockSpec((D, D), lambda b, i: (0, 0)),              # Wv^T
            pl.BlockSpec((1, D), lambda b, i: (0, 0)),              # bv
            pl.BlockSpec((heads, s_h, D), lambda b, i: (0, 0, 0)),  # Wo^T per-head rows
            pl.BlockSpec((1, D), lambda b, i: (0, 0)),              # bo
        ],
        out_specs=pl.BlockSpec((1, tq, D), lambda b, i: (b, i, 0)),
        scratch_shapes=[pltpu.VMEM((Lk, D), bf16),                  # projected K (all heads)
                        pltpu.VMEM((Lv, D), bf16)],                 # projected V (all heads)
        compiler_params=pltpu.CompilerParams(
            dimension_semantics=("parallel", "arbitrary"),
            vmem_limit_bytes=64 * 1024 * 1024),
    )(q_in, k, v, wq_t, bq_r, wk_t, bk_r, wv_t, bv_r, wo_h, bo_r)

    if Lq_pad != Lq:
        out = out[:, :Lq]
    # PyTorch forward yields (B, Lq, 1, d_model) because of view(..., -1, h, s_h).
    return out.reshape(B, Lq, 1, D)


def _init_linear(key, d_in, d_out):
    # Matches nn.Linear default init: U(-1/sqrt(fan_in), 1/sqrt(fan_in))
    kw, kb = jax.random.split(key)
    bound = 1.0 / math.sqrt(d_in)
    w = jax.random.uniform(kw, (d_out, d_in), jnp.float32, -bound, bound)
    b = jax.random.uniform(kb, (d_out,), jnp.float32, -bound, bound)
    return w, b


def _ref_forward(q, k, v, params, heads):
    # Pure-JAX f32 reference mirroring the PyTorch code (eval mode, mask=None).
    wq, bq, wk, bk, wv, bv, wo, bo = params
    B, Lq, D = q.shape
    s_h = D // heads

    def proj_split(x, w, b):
        y = x @ w.T + b                                   # (B, L, D)
        L = x.shape[1]
        y = y.reshape(B, L, 1, heads, s_h)                # view
        return jnp.transpose(y, (0, 3, 2, 1, 4))          # transpose(1, 3)

    qh = proj_split(q, wq, bq)                            # (B, h, 1, Lq, s_h)
    kh = proj_split(k, wk, bk)
    vh = proj_split(v, wv, bv)

    A = jnp.matmul(qh, jnp.swapaxes(kh, -2, -1)) / jnp.sqrt(jnp.float32(s_h))
    A = jax.nn.softmax(A, axis=-1)
    out = jnp.matmul(A, vh)                               # (B, h, 1, Lq, s_h)
    concat = jnp.transpose(out, (0, 3, 2, 1, 4)).reshape(B, Lq, 1, D)
    return concat @ wo.T + bo


if __name__ == "__main__":
    d_model = 32
    heads = 4
    B = 2
    L = 8

    key = jax.random.PRNGKey(0)
    kq, kk, kv, kp1, kp2, kp3, kp4 = jax.random.split(key, 7)

    q = jax.random.normal(kq, (B, L, d_model), jnp.float32)
    k = jax.random.normal(kk, (B, L, d_model), jnp.float32)
    v = jax.random.normal(kv, (B, L, d_model), jnp.float32)

    wq, bq = _init_linear(kp1, d_model, d_model)
    wk, bk = _init_linear(kp2, d_model, d_model)
    wv, bv = _init_linear(kp3, d_model, d_model)
    wo, bo = _init_linear(kp4, d_model, d_model)
    params = (wq, bq, wk, bk, wv, bv, wo, bo)

    out = multi_head_self_attention(q, k, v, params, heads)
    out = jax.block_until_ready(out)

    ref = _ref_forward(q, k, v, params, heads)
    assert out.shape == (B, L, 1, d_model), out.shape
    # bf16 MXU operands + approximate reciprocal -> relaxed tolerance versus
    # the f32 reference; softmax/accumulation stay in f32.
    max_err = float(jnp.max(jnp.abs(out - ref)))
    assert jnp.allclose(out, ref, atol=7e-2, rtol=7e-2), max_err

    print("KERNEL_OK")
</pallas_src>

<mosaic_0001>
module attributes {stable_mosaic.version = 11 : i64} {
  func.func @kernel(%arg0: i32, %arg1: i32, %arg2: memref<1x8x32xf32, #tpu.memory_space<vmem>>, %arg3: memref<1x8x32xf32, #tpu.memory_space<vmem>>, %arg4: memref<1x8x32xf32, #tpu.memory_space<vmem>>, %arg5: memref<32x32xbf16, #tpu.memory_space<vmem>>, %arg6: memref<1x32xf32, #tpu.memory_space<vmem>>, %arg7: memref<32x32xbf16, #tpu.memory_space<vmem>>, %arg8: memref<1x32xf32, #tpu.memory_space<vmem>>, %arg9: memref<32x32xbf16, #tpu.memory_space<vmem>>, %arg10: memref<1x32xf32, #tpu.memory_space<vmem>>, %arg11: memref<4x8x32xbf16, #tpu.memory_space<vmem>>, %arg12: memref<1x32xf32, #tpu.memory_space<vmem>>, %arg13: memref<1x8x32xf32, #tpu.memory_space<vmem>>, %arg14: memref<8x32xbf16, #tpu.memory_space<vmem>>, %arg15: memref<8x32xbf16, #tpu.memory_space<vmem>>) attributes {dimension_semantics = [#tpu.dimension_semantics<parallel>, #tpu.dimension_semantics<arbitrary>], iteration_bounds = array<i64: 2, 1>, scalar_prefetch = 0 : i64, scratch_operands = 2 : i64, tpu.core_type = #tpu.core_type<tc>, window_params = [{transform_indices = @transform_0, window_bounds = array<i64: 1, 8, 32>}, {transform_indices = @transform_1, window_bounds = array<i64: 1, 8, 32>}, {transform_indices = @transform_2, window_bounds = array<i64: 1, 8, 32>}, {pipeline_mode = #tpu.pipeline_mode<synchronous>, transform_indices = @transform_3, window_bounds = array<i64: 32, 32>}, {pipeline_mode = #tpu.pipeline_mode<synchronous>, transform_indices = @transform_4, window_bounds = array<i64: 1, 32>}, {pipeline_mode = #tpu.pipeline_mode<synchronous>, transform_indices = @transform_5, window_bounds = array<i64: 32, 32>}, {pipeline_mode = #tpu.pipeline_mode<synchronous>, transform_indices = @transform_6, window_bounds = array<i64: 1, 32>}, {pipeline_mode = #tpu.pipeline_mode<synchronous>, transform_indices = @transform_7, window_bounds = array<i64: 32, 32>}, {pipeline_mode = #tpu.pipeline_mode<synchronous>, transform_indices = @transform_8, window_bounds = array<i64: 1, 32>}, {pipeline_mode = #tpu.pipeline_mode<synchronous>, transform_indices = @transform_9, window_bounds = array<i64: 4, 8, 32>}, {pipeline_mode = #tpu.pipeline_mode<synchronous>, transform_indices = @transform_10, window_bounds = array<i64: 1, 32>}, {transform_indices = @transform_11, window_bounds = array<i64: 1, 8, 32>}]} {
    %c0_i32 = arith.constant 0 : i32
    %0 = arith.cmpi eq, %arg1, %c0_i32 : i32
    %1 = arith.extui %0 : i1 to i32
    %c0_i32_0 = arith.constant 0 : i32
    %2 = arith.cmpi ne, %1, %c0_i32_0 : i32
    scf.if %2 {
      %c0_55 = arith.constant 0 : index
      %c0_56 = arith.constant 0 : index
      %c0_57 = arith.constant 0 : index
      %103 = vector.load %arg3[%c0_55, %c0_56, %c0_57] : memref<1x8x32xf32, #tpu.memory_space<vmem>>, vector<1x8x32xf32>
      %104 = vector.shape_cast %103 : vector<1x8x32xf32> to vector<8x32xf32>
      %105 = arith.truncf %104 : vector<8x32xf32> to vector<8x32xbf16>
      %c0_58 = arith.constant 0 : index
      %c0_59 = arith.constant 0 : index
      %c0_60 = arith.constant 0 : index
      %106 = vector.load %arg4[%c0_58, %c0_59, %c0_60] : memref<1x8x32xf32, #tpu.memory_space<vmem>>, vector<1x8x32xf32>
      %107 = vector.shape_cast %106 : vector<1x8x32xf32> to vector<8x32xf32>
      %108 = arith.truncf %107 : vector<8x32xf32> to vector<8x32xbf16>
      %c0_61 = arith.constant 0 : index
      %c0_62 = arith.constant 0 : index
      %109 = vector.load %arg7[%c0_61, %c0_62] : memref<32x32xbf16, #tpu.memory_space<vmem>>, vector<32x32xbf16>
      %cst_63 = arith.constant dense<0.000000e+00> : vector<8x32xf32>
      %110 = tpu.matmul %105, %109, %cst_63 {dimension_numbers = #tpu.dot_dimension_numbers<[1], [0], [0], [1], [0, 0, 1, 1], [], []>} : vector<8x32xbf16>, vector<32x32xbf16>, vector<8x32xf32> -> vector<8x32xf32>
      %c0_64 = arith.constant 0 : index
      %c0_65 = arith.constant 0 : index
      %111 = vector.load %arg8[%c0_64, %c0_65] : memref<1x32xf32, #tpu.memory_space<vmem>>, vector<1x32xf32>
      %112 = vector.broadcast %111 : vector<1x32xf32> to vector<8x32xf32>
      %113 = arith.addf %110, %112 : vector<8x32xf32>
      %114 = arith.truncf %113 : vector<8x32xf32> to vector<8x32xbf16>
      %c0_66 = arith.constant 0 : index
      %c0_67 = arith.constant 0 : index
      %115 = vector.load %arg14[%c0_66, %c0_67] : memref<8x32xbf16, #tpu.memory_space<vmem>>, vector<8x32xbf16>
      tpu.vector_store %arg14[%c0_66, %c0_67], %114 {strides = array<i32>} : memref<8x32xbf16, #tpu.memory_space<vmem>>, vector<8x32xbf16>,
      %c0_68 = arith.constant 0 : index
      %c0_69 = arith.constant 0 : index
      %116 = vector.load %arg9[%c0_68, %c0_69] : memref<32x32xbf16, #tpu.memory_space<vmem>>, vector<32x32xbf16>
      %cst_70 = arith.constant dense<0.000000e+00> : vector<8x32xf32>
      %117 = tpu.matmul %108, %116, %cst_70 {dimension_numbers = #tpu.dot_dimension_numbers<[1], [0], [0], [1], [0, 0, 1, 1], [], []>} : vector<8x32xbf16>, vector<32x32xbf16>, vector<8x32xf32> -> vector<8x32xf32>
      %c0_71 = arith.constant 0 : index
      %c0_72 = arith.constant 0 : index
      %118 = vector.load %arg10[%c0_71, %c0_72] : memref<1x32xf32, #tpu.memory_space<vmem>>, vector<1x32xf32>
      %119 = vector.broadcast %118 : vector<1x32xf32> to vector<8x32xf32>
      %120 = arith.addf %117, %119 : vector<8x32xf32>
      %121 = arith.truncf %120 : vector<8x32xf32> to vector<8x32xbf16>
      %c0_73 = arith.constant 0 : index
      %c0_74 = arith.constant 0 : index
      %122 = vector.load %arg15[%c0_73, %c0_74] : memref<8x32xbf16, #tpu.memory_space<vmem>>, vector<8x32xbf16>
      tpu.vector_store %arg15[%c0_73, %c0_74], %121 {strides = array<i32>} : memref<8x32xbf16, #tpu.memory_space<vmem>>, vector<8x32xbf16>,
    } else {
    }
    %c0 = arith.constant 0 : index
    %c0_1 = arith.constant 0 : index
    %c0_2 = arith.constant 0 : index
    %3 = vector.load %arg2[%c0, %c0_1, %c0_2] : memref<1x8x32xf32, #tpu.memory_space<vmem>>, vector<1x8x32xf32>
    %4 = vector.shape_cast %3 : vector<1x8x32xf32> to vector<8x32xf32>
    %5 = arith.truncf %4 : vector<8x32xf32> to vector<8x32xbf16>
    %c0_3 = arith.constant 0 : index
    %c0_4 = arith.constant 0 : index
    %6 = vector.load %arg5[%c0_3, %c0_4] : memref<32x32xbf16, #tpu.memory_space<vmem>>, vector<32x32xbf16>
    %cst = arith.constant dense<0.000000e+00> : vector<8x32xf32>
    %7 = tpu.matmul %5, %6, %cst {dimension_numbers = #tpu.dot_dimension_numbers<[1], [0], [0], [1], [0, 0, 1, 1], [], []>} : vector<8x32xbf16>, vector<32x32xbf16>, vector<8x32xf32> -> vector<8x32xf32>
    %c0_5 = arith.constant 0 : index
    %c0_6 = arith.constant 0 : index
    %8 = vector.load %arg6[%c0_5, %c0_6] : memref<1x32xf32, #tpu.memory_space<vmem>>, vector<1x32xf32>
    %9 = vector.broadcast %8 : vector<1x32xf32> to vector<8x32xf32>
    %10 = arith.addf %7, %9 : vector<8x32xf32>
    %11 = arith.truncf %10 : vector<8x32xf32> to vector<8x32xbf16>
    %cst_7 = arith.constant 0.000000e+00 : f32
    %12 = vector.broadcast %cst_7 : f32 to vector<8x32xf32>
    %13 = vector.extract_strided_slice %11 {offsets = [0, 0], sizes = [8, 8], strides = [1, 1]} : vector<8x32xbf16> to vector<8x8xbf16>
    %c0_8 = arith.constant 0 : index
    %c0_9 = arith.constant 0 : index
    %14 = vector.load %arg14[%c0_8, %c0_9] : memref<8x32xbf16, #tpu.memory_space<vmem>>, vector<8x8xbf16>
    %c0_10 = arith.constant 0 : index
    %c0_11 = arith.constant 0 : index
    %15 = vector.load %arg15[%c0_10, %c0_11] : memref<8x32xbf16, #tpu.memory_space<vmem>>, vector<8x8xbf16>
    %cst_12 = arith.constant dense<0.000000e+00> : vector<8x8xf32>
    %16 = tpu.matmul %13, %14, %cst_12 {dimension_numbers = #tpu.dot_dimension_numbers<[1], [1], [0], [0], [0, 0, 1, 0], [], []>} : vector<8x8xbf16>, vector<8x8xbf16>, vector<8x8xf32> -> vector<8x8xf32>
    %cst_13 = arith.constant dense<0xFF800000> : vector<8xf32>
    %17 = vector.multi_reduction <maximumf>, %16, %cst_13 [1] : vector<8x8xf32> to vector<8xf32>
    %18 = vector.shape_cast %17 : vector<8xf32> to vector<8x1xf32>
    %19 = vector.broadcast %18 : vector<8x1xf32> to vector<8x8xf32>
    %20 = arith.subf %16, %19 : vector<8x8xf32>
    %21 = math.exp %20 : vector<8x8xf32>
    %cst_14 = arith.constant dense<0.000000e+00> : vector<8xf32>
    %22 = vector.multi_reduction <add>, %21, %cst_14 [1] : vector<8x8xf32> to vector<8xf32>
    %23 = vector.shape_cast %22 : vector<8xf32> to vector<8x1xf32>
    %24 = tpu.reciprocal %23 {approx = true} : vector<8x1xf32> -> vector<8x1xf32>
    %25 = vector.broadcast %24 : vector<8x1xf32> to vector<8x8xf32>
    %26 = arith.mulf %21, %25 : vector<8x8xf32>
    %27 = arith.truncf %26 : vector<8x8xf32> to vector<8x8xbf16>
    %cst_15 = arith.constant dense<0.000000e+00> : vector<8x8xf32>
    %28 = tpu.matmul %27, %15, %cst_15 {dimension_numbers = #tpu.dot_dimension_numbers<[1], [0], [0], [1], [0, 0, 1, 1], [], []>} : vector<8x8xbf16>, vector<8x8xbf16>, vector<8x8xf32> -> vector<8x8xf32>
    %29 = arith.truncf %28 : vector<8x8xf32> to vector<8x8xbf16>
    %c0_16 = arith.constant 0 : index
    %c0_17 = arith.constant 0 : index
    %c0_18 = arith.constant 0 : index
    %30 = vector.load %arg11[%c0_16, %c0_17, %c0_18] : memref<4x8x32xbf16, #tpu.memory_space<vmem>>, vector<1x8x32xbf16>
    %31 = vector.shape_cast %30 : vector<1x8x32xbf16> to vector<8x32xbf16>
    %cst_19 = arith.constant dense<0.000000e+00> : vector<8x32xf32>
    %32 = tpu.matmul %29, %31, %cst_19 {dimension_numbers = #tpu.dot_dimension_numbers<[1], [0], [0], [1], [0, 0, 1, 1], [], []>} : vector<8x8xbf16>, vector<8x32xbf16>, vector<8x32xf32> -> vector<8x32xf32>
    %33 = arith.addf %12, %32 : vector<8x32xf32>
    %34 = vector.extract_strided_slice %11 {offsets = [0, 8], sizes = [8, 8], strides = [1, 1]} : vector<8x32xbf16> to vector<8x8xbf16>
    %c0_20 = arith.constant 0 : index
    %c8 = arith.constant 8 : index
    %35 = vector.load %arg14[%c0_20, %c8] : memref<8x32xbf16, #tpu.memory_space<vmem>>, vector<8x8xbf16>
    %c0_21 = arith.constant 0 : index
    %c8_22 = arith.constant 8 : index
    %36 = vector.load %arg15[%c0_21, %c8_22] : memref<8x32xbf16, #tpu.memory_space<vmem>>, vector<8x8xbf16>
    %cst_23 = arith.constant dense<0.000000e+00> : vector<8x8xf32>
    %37 = tpu.matmul %34, %35, %cst_23 {dimension_numbers = #tpu.dot_dimension_numbers<[1], [1], [0], [0], [0, 0, 1, 0], [], []>} : vector<8x8xbf16>, vector<8x8xbf16>, vector<8x8xf32> -> vector<8x8xf32>
    %cst_24 = arith.constant dense<0xFF800000> : vector<8xf32>
    %38 = vector.multi_reduction <maximumf>, %37, %cst_24 [1] : vector<8x8xf32> to vector<8xf32>
    %39 = vector.shape_cast %38 : vector<8xf32> to vector<8x1xf32>
    %40 = vector.broadcast %39 : vector<8x1xf32> to vector<8x8xf32>
    %41 = arith.subf %37, %40 : vector<8x8xf32>
    %42 = math.exp %41 : vector<8x8xf32>
    %cst_25 = arith.constant dense<0.000000e+00> : vector<8xf32>
    %43 = vector.multi_reduction <add>, %42, %cst_25 [1] : vector<8x8xf32> to vector<8xf32>
    %44 = vector.shape_cast %43 : vector<8xf32> to vector<8x1xf32>
    %45 = tpu.reciprocal %44 {approx = true} : vector<8x1xf32> -> vector<8x1xf32>
    %46 = vector.broadcast %45 : vector<8x1xf32> to vector<8x8xf32>
    %47 = arith.mulf %42, %46 : vector<8x8xf32>
    %48 = arith.truncf %47 : vector<8x8xf32> to vector<8x8xbf16>
    %cst_26 = arith.constant dense<0.000000e+00> : vector<8x8xf32>
    %49 = tpu.matmul %48, %36, %cst_26 {dimension_numbers = #tpu.dot_dimension_numbers<[1], [0], [0], [1], [0, 0, 1, 1], [], []>} : vector<8x8xbf16>, vector<8x8xbf16>, vector<8x8xf32> -> vector<8x8xf32>
    %50 = arith.truncf %49 : vector<8x8xf32> to vector<8x8xbf16>
    %c1 = arith.constant 1 : index
    %c0_27 = arith.constant 0 : index
    %c0_28 = arith.constant 0 : index
    %51 = vector.load %arg11[%c1, %c0_27, %c0_28] : memref<4x8x32xbf16, #tpu.memory_space<vmem>>, vector<1x8x32xbf16>
    %52 = vector.shape_cast %51 : vector<1x8x32xbf16> to vector<8x32xbf16>
    %cst_29 = arith.constant dense<0.000000e+00> : vector<8x32xf32>
    %53 = tpu.matmul %50, %52, %cst_29 {dimension_numbers = #tpu.dot_dimension_numbers<[1], [0], [0], [1], [0, 0, 1, 1], [], []>} : vector<8x8xbf16>, vector<8x32xbf16>, vector<8x32xf32> -> vector<8x32xf32>
    %54 = arith.addf %33, %53 : vector<8x32xf32>
    %55 = vector.extract_strided_slice %11 {offsets = [0, 16], sizes = [8, 8], strides = [1, 1]} : vector<8x32xbf16> to vector<8x8xbf16>
    %c0_30 = arith.constant 0 : index
    %c16 = arith.constant 16 : index
    %56 = vector.load %arg14[%c0_30, %c16] : memref<8x32xbf16, #tpu.memory_space<vmem>>, vector<8x8xbf16>
    %c0_31 = arith.constant 0 : index
    %c16_32 = arith.constant 16 : index
    %57 = vector.load %arg15[%c0_31, %c16_32] : memref<8x32xbf16, #tpu.memory_space<vmem>>, vector<8x8xbf16>
    %cst_33 = arith.constant dense<0.000000e+00> : vector<8x8xf32>
    %58 = tpu.matmul %55, %56, %cst_33 {dimension_numbers = #tpu.dot_dimension_numbers<[1], [1], [0], [0], [0, 0, 1, 0], [], []>} : vector<8x8xbf16>, vector<8x8xbf16>, vector<8x8xf32> -> vector<8x8xf32>
    %cst_34 = arith.constant dense<0xFF800000> : vector<8xf32>
    %59 = vector.multi_reduction <maximumf>, %58, %cst_34 [1] : vector<8x8xf32> to vector<8xf32>
    %60 = vector.shape_cast %59 : vector<8xf32> to vector<8x1xf32>
    %61 = vector.broadcast %60 : vector<8x1xf32> to vector<8x8xf32>
    %62 = arith.subf %58, %61 : vector<8x8xf32>
    %63 = math.exp %62 : vector<8x8xf32>
    %cst_35 = arith.constant dense<0.000000e+00> : vector<8xf32>
    %64 = vector.multi_reduction <add>, %63, %cst_35 [1] : vector<8x8xf32> to vector<8xf32>
    %65 = vector.shape_cast %64 : vector<8xf32> to vector<8x1xf32>
    %66 = tpu.reciprocal %65 {approx = true} : vector<8x1xf32> -> vector<8x1xf32>
    %67 = vector.broadcast %66 : vector<8x1xf32> to vector<8x8xf32>
    %68 = arith.mulf %63, %67 : vector<8x8xf32>
    %69 = arith.truncf %68 : vector<8x8xf32> to vector<8x8xbf16>
    %cst_36 = arith.constant dense<0.000000e+00> : vector<8x8xf32>
    %70 = tpu.matmul %69, %57, %cst_36 {dimension_numbers = #tpu.dot_dimension_numbers<[1], [0], [0], [1], [0, 0, 1, 1], [], []>} : vector<8x8xbf16>, vector<8x8xbf16>, vector<8x8xf32> -> vector<8x8xf32>
    %71 = arith.truncf %70 : vector<8x8xf32> to vector<8x8xbf16>
    %c2 = arith.constant 2 : index
    %c0_37 = arith.constant 0 : index
    %c0_38 = arith.constant 0 : index
    %72 = vector.load %arg11[%c2, %c0_37, %c0_38] : memref<4x8x32xbf16, #tpu.memory_space<vmem>>, vector<1x8x32xbf16>
    %73 = vector.shape_cast %72 : vector<1x8x32xbf16> to vector<8x32xbf16>
    %cst_39 = arith.constant dense<0.000000e+00> : vector<8x32xf32>
    %74 = tpu.matmul %71, %73, %cst_39 {dimension_numbers = #tpu.dot_dimension_numbers<[1], [0], [0], [1], [0, 0, 1, 1], [], []>} : vector<8x8xbf16>, vector<8x32xbf16>, vector<8x32xf32> -> vector<8x32xf32>
    %75 = arith.addf %54, %74 : vector<8x32xf32>
    %76 = vector.extract_strided_slice %11 {offsets = [0, 24], sizes = [8, 8], strides = [1, 1]} : vector<8x32xbf16> to vector<8x8xbf16>
    %c0_40 = arith.constant 0 : index
    %c24 = arith.constant 24 : index
    %77 = vector.load %arg14[%c0_40, %c24] : memref<8x32xbf16, #tpu.memory_space<vmem>>, vector<8x8xbf16>
    %c0_41 = arith.constant 0 : index
    %c24_42 = arith.constant 24 : index
    %78 = vector.load %arg15[%c0_41, %c24_42] : memref<8x32xbf16, #tpu.memory_space<vmem>>, vector<8x8xbf16>
    %cst_43 = arith.constant dense<0.000000e+00> : vector<8x8xf32>
    %79 = tpu.matmul %76, %77, %cst_43 {dimension_numbers = #tpu.dot_dimension_numbers<[1], [1], [0], [0], [0, 0, 1, 0], [], []>} : vector<8x8xbf16>, vector<8x8xbf16>, vector<8x8xf32> -> vector<8x8xf32>
    %cst_44 = arith.constant dense<0xFF800000> : vector<8xf32>
    %80 = vector.multi_reduction <maximumf>, %79, %cst_44 [1] : vector<8x8xf32> to vector<8xf32>
    %81 = vector.shape_cast %80 : vector<8xf32> to vector<8x1xf32>
    %82 = vector.broadcast %81 : vector<8x1xf32> to vector<8x8xf32>
    %83 = arith.subf %79, %82 : vector<8x8xf32>
    %84 = math.exp %83 : vector<8x8xf32>
    %cst_45 = arith.constant dense<0.000000e+00> : vector<8xf32>
    %85 = vector.multi_reduction <add>, %84, %cst_45 [1] : vector<8x8xf32> to vector<8xf32>
    %86 = vector.shape_cast %85 : vector<8xf32> to vector<8x1xf32>
    %87 = tpu.reciprocal %86 {approx = true} : vector<8x1xf32> -> vector<8x1xf32>
    %88 = vector.broadcast %87 : vector<8x1xf32> to vector<8x8xf32>
    %89 = arith.mulf %84, %88 : vector<8x8xf32>
    %90 = arith.truncf %89 : vector<8x8xf32> to vector<8x8xbf16>
    %cst_46 = arith.constant dense<0.000000e+00> : vector<8x8xf32>
    %91 = tpu.matmul %90, %78, %cst_46 {dimension_numbers = #tpu.dot_dimension_numbers<[1], [0], [0], [1], [0, 0, 1, 1], [], []>} : vector<8x8xbf16>, vector<8x8xbf16>, vector<8x8xf32> -> vector<8x8xf32>
    %92 = arith.truncf %91 : vector<8x8xf32> to vector<8x8xbf16>
    %c3 = arith.constant 3 : index
    %c0_47 = arith.constant 0 : index
    %c0_48 = arith.constant 0 : index
    %93 = vector.load %arg11[%c3, %c0_47, %c0_48] : memref<4x8x32xbf16, #tpu.memory_space<vmem>>, vector<1x8x32xbf16>
    %94 = vector.shape_cast %93 : vector<1x8x32xbf16> to vector<8x32xbf16>
    %cst_49 = arith.constant dense<0.000000e+00> : vector<8x32xf32>
    %95 = tpu.matmul %92, %94, %cst_49 {dimension_numbers = #tpu.dot_dimension_numbers<[1], [0], [0], [1], [0, 0, 1, 1], [], []>} : vector<8x8xbf16>, vector<8x32xbf16>, vector<8x32xf32> -> vector<8x32xf32>
    %96 = arith.addf %75, %95 : vector<8x32xf32>
    %c0_50 = arith.constant 0 : index
    %c0_51 = arith.constant 0 : index
    %97 = vector.load %arg12[%c0_50, %c0_51] : memref<1x32xf32, #tpu.memory_space<vmem>>, vector<1x32xf32>
    %98 = vector.broadcast %97 : vector<1x32xf32> to vector<8x32xf32>
    %99 = arith.addf %96, %98 : vector<8x32xf32>
    %c0_52 = arith.constant 0 : index
    %c0_53 = arith.constant 0 : index
    %c0_54 = arith.constant 0 : index
    %100 = vector.load %arg13[%c0_52, %c0_53, %c0_54] : memref<1x8x32xf32, #tpu.memory_space<vmem>>, vector<1x8x32xf32>
    %101 = vector.shape_cast %100 : vector<1x8x32xf32> to vector<8x32xf32>
    %102 = vector.shape_cast %99 : vector<8x32xf32> to vector<1x8x32xf32>
    tpu.vector_store %arg13[%c0_52, %c0_53, %c0_54], %102 {strides = array<i32>} : memref<1x8x32xf32, #tpu.memory_space<vmem>>, vector<1x8x32xf32>,
    return
  }
  func.func @transform_0(%arg0: i32, %arg1: i32) -> (i32, i32, i32) {
    %c0_i32 = arith.constant 0 : i32
    %c0_i32_0 = arith.constant 0 : i32
    return %arg0, %arg1, %c0_i32 : i32, i32, i32
  }
  func.func @transform_1(%arg0: i32, %arg1: i32) -> (i32, i32, i32) {
    %c0_i32 = arith.constant 0 : i32
    %c0_i32_0 = arith.constant 0 : i32
    %c0_i32_1 = arith.constant 0 : i32
    return %arg0, %c0_i32, %c0_i32_0 : i32, i32, i32
  }
  func.func @transform_2(%arg0: i32, %arg1: i32) -> (i32, i32, i32) {
    %c0_i32 = arith.constant 0 : i32
    %c0_i32_0 = arith.constant 0 : i32
    %c0_i32_1 = arith.constant 0 : i32
    return %arg0, %c0_i32, %c0_i32_0 : i32, i32, i32
  }
  func.func @transform_3(%arg0: i32, %arg1: i32) -> (i32, i32) {
    %c0_i32 = arith.constant 0 : i32
    %c0_i32_0 = arith.constant 0 : i32
    %c0_i32_1 = arith.constant 0 : i32
    return %c0_i32, %c0_i32_0 : i32, i32
  }
  func.func @transform_4(%arg0: i32, %arg1: i32) -> (i32, i32) {
    %c0_i32 = arith.constant 0 : i32
    %c0_i32_0 = arith.constant 0 : i32
    %c0_i32_1 = arith.constant 0 : i32
    return %c0_i32, %c0_i32_0 : i32, i32
  }
  func.func @transform_5(%arg0: i32, %arg1: i32) -> (i32, i32) {
    %c0_i32 = arith.constant 0 : i32
    %c0_i32_0 = arith.constant 0 : i32
    %c0_i32_1 = arith.constant 0 : i32
    return %c0_i32, %c0_i32_0 : i32, i32
  }
  func.func @transform_6(%arg0: i32, %arg1: i32) -> (i32, i32) {
    %c0_i32 = arith.constant 0 : i32
    %c0_i32_0 = arith.constant 0 : i32
    %c0_i32_1 = arith.constant 0 : i32
    return %c0_i32, %c0_i32_0 : i32, i32
  }
  func.func @transform_7(%arg0: i32, %arg1: i32) -> (i32, i32) {
    %c0_i32 = arith.constant 0 : i32
    %c0_i32_0 = arith.constant 0 : i32
    %c0_i32_1 = arith.constant 0 : i32
    return %c0_i32, %c0_i32_0 : i32, i32
  }
  func.func @transform_8(%arg0: i32, %arg1: i32) -> (i32, i32) {
    %c0_i32 = arith.constant 0 : i32
    %c0_i32_0 = arith.constant 0 : i32
    %c0_i32_1 = arith.constant 0 : i32
    return %c0_i32, %c0_i32_0 : i32, i32
  }
  func.func @transform_9(%arg0: i32, %arg1: i32) -> (i32, i32, i32) {
    %c0_i32 = arith.constant 0 : i32
    %c0_i32_0 = arith.constant 0 : i32
    %c0_i32_1 = arith.constant 0 : i32
    %c0_i32_2 = arith.constant 0 : i32
    return %c0_i32, %c0_i32_0, %c0_i32_1 : i32, i32, i32
  }
  func.func @transform_10(%arg0: i32, %arg1: i32) -> (i32, i32) {
    %c0_i32 = arith.constant 0 : i32
    %c0_i32_0 = arith.constant 0 : i32
    %c0_i32_1 = arith.constant 0 : i32
    return %c0_i32, %c0_i32_0 : i32, i32
  }
  func.func @transform_11(%arg0: i32, %arg1: i32) -> (i32, i32, i32) {
    %c0_i32 = arith.constant 0 : i32
    %c0_i32_0 = arith.constant 0 : i32
    return %arg0, %arg1, %c0_i32 : i32, i32, i32
  }
}

</mosaic_0001>

<llo_original>
// kernel: tpu_custom_call.1
$region0: #{tpu_custom_call.1}
  #allocation0 [shape = 'u32[]', space=smem, size = 0x4, offset = 0x4, fixed_abs, tag = 'smem constant byte address 0x4 - core index']
  #allocation1 [shape = 'u32[144,128]{1,0:T(1,128)}', space=vmem, size = 0x12000, scoped, tag = 'internal scratch']
  #allocation2 [shape = 'bf16[8,32]{1,0:T(8,128)(2,1)}', space=vmem, size = 0x800, scoped, tag = 'scratch operand']
  #allocation3 [shape = 'bf16[8,32]{1,0:T(8,128)(2,1)}', space=vmem, size = 0x800, scoped, tag = 'scratch operand']
  %s0 = inlined_call_operand.hbm [shape: f32[2,8,32], index: 0, kind: input, shape index: {}]
  %s1 = inlined_call_operand.hbm [shape: f32[2,8,32], index: 1, kind: input, shape index: {}]
  %s2 = inlined_call_operand.hbm [shape: f32[2,8,32], index: 2, kind: input, shape index: {}]
  %s3 = inlined_call_operand.hbm [shape: bf16[32,32], index: 3, kind: input, shape index: {}]
  %s4 = inlined_call_operand.hbm [shape: f32[1,32], index: 4, kind: input, shape index: {}]
  %s5 = inlined_call_operand.hbm [shape: bf16[32,32], index: 5, kind: input, shape index: {}]
  %s6 = inlined_call_operand.hbm [shape: f32[1,32], index: 6, kind: input, shape index: {}]
  %s7 = inlined_call_operand.hbm [shape: bf16[32,32], index: 7, kind: input, shape index: {}]
  %s8 = inlined_call_operand.hbm [shape: f32[1,32], index: 8, kind: input, shape index: {}]
  %s9 = inlined_call_operand.hbm [shape: bf16[4,8,32], index: 9, kind: input, shape index: {}]
  %s10 = inlined_call_operand.hbm [shape: f32[1,32], index: 10, kind: input, shape index: {}]
  %s11 = inlined_call_operand.hbm [shape: f32[2,8,32], index: 11, kind: output, shape index: {}]
  %s12 = sld [smem:[#allocation0]]
  $region125: #{tpu_custom_call.1} parent=0
    _
  %s14 = ssub.s32 1, %s12
  %s15 = scalar_select 0, %s14, %s12
  $region1: #{tpu_custom_call.1} parent=0
    #allocation4 [shape = 'u8[8192]{0}', space=vmem, size = 0x2000, scoped, tag = 'input window, operand 0']
    #allocation5 [shape = 's32[2]{0}', space=sflag, size = 0x8, scoped, tag = 'scoped memory for tpu_custom_call.1']
    #allocation6 [shape = 's32[2]{0}', space=sflag, size = 0x8, scoped, tag = 'scoped memory for tpu_custom_call.1']
    #allocation7 [shape = 'u8[8192]{0}', space=vmem, size = 0x2000, scoped, tag = 'input window, operand 1']
    #allocation8 [shape = 's32[2]{0}', space=sflag, size = 0x8, scoped, tag = 'scoped memory for tpu_custom_call.1']
    #allocation9 [shape = 'u8[8192]{0}', space=vmem, size = 0x2000, scoped, tag = 'input window, operand 2']
    #allocation10 [shape = 'u8[8192]{0}', space=vmem, size = 0x2000, scoped, tag = 'input window, operand 3, single buffered']
    #allocation11 [shape = 's32[1]{0}', space=sflag, size = 0x4, scoped, tag = 'scoped memory for tpu_custom_call.1']
    #allocation12 [shape = 'u8[512]{0}', space=vmem, size = 0x400, scoped, tag = 'input window, operand 4, single buffered']
    #allocation13 [shape = 'u8[8192]{0}', space=vmem, size = 0x2000, scoped, tag = 'input window, operand 5, single buffered']
    #allocation14 [shape = 's32[1]{0}', space=sflag, size = 0x4, scoped, tag = 'scoped memory for tpu_custom_call.1']
    #allocation15 [shape = 'u8[512]{0}', space=vmem, size = 0x400, scoped, tag = 'input window, operand 6, single buffered']
    #allocation16 [shape = 'u8[8192]{0}', space=vmem, size = 0x2000, scoped, tag = 'input window, operand 7, single buffered']
    #allocation17 [shape = 's32[1]{0}', space=sflag, size = 0x4, scoped, tag = 'scoped memory for tpu_custom_call.1']
    #allocation18 [shape = 'u8[512]{0}', space=vmem, size = 0x400, scoped, tag = 'input window, operand 8, single buffered']
    #allocation19 [shape = 'u8[8192]{0}', space=vmem, size = 0x2000, scoped, tag = 'input window, operand 9, single buffered']
    #allocation20 [shape = 's32[1]{0}', space=sflag, size = 0x4, scoped, tag = 'scoped memory for tpu_custom_call.1']
    #allocation21 [shape = 'u8[512]{0}', space=vmem, size = 0x400, scoped, tag = 'input window, operand 10, single buffered']
    #allocation22 [shape = 'u8[8192]{0}', space=vmem, size = 0x2000, scoped, tag = 'output window, operand 0']
    %16 = vsyncpa [#allocation5], 0
    %s17 = scalar_lea.sflag [#allocation5], 1
    %18 = vsyncpa %s17, 0
    %19 = vsyncpa [#allocation8], 0
    %s20 = scalar_lea.sflag [#allocation8], 1
    %21 = vsyncpa %s20, 0
    %22 = vsyncpa [#allocation11], 0
    %23 = vsyncpa [#allocation14], 0
    %24 = vsyncpa [#allocation17], 0
    %25 = vsyncpa [#allocation20], 0
    %26 = vsyncpa [#allocation6], 0
    %s27 = scalar_lea.sflag [#allocation6], 1
    %28 = vsyncpa %s27, 0
    loop: start=0, step=1, limit=4
    $region2: #{tpu_custom_call.1} parent=1 // loop_pre_header
      _
    $region3: #{tpu_custom_call.1} parent=1 // loop_header
      %s30 = sphi 0, %s34
      %p31 = scmp.ge.s32.totalorder %s30, 4
      %s37 = sphi 0, %s49
      %s38 = sphi 0, %s45
      %s39 = sphi 0, %s37
      %s40 = sphi 0, %s38
      %s41 = sphi 0, %s39
      %s42 = sphi 0, %s40
      %s54 = sphi 0, %s56
      %s57 = sphi 0, %s54
      %s58 = sphi 0, %s57
      %s74 = sphi 0, %s58
      %s80 = sphi 0, %s82
      %s83 = sphi 0, %s80
      %s84 = sphi 0, %s83
      %s100 = sphi 0, %s84
      %s106 = sphi 0, %s108
      %s109 = sphi 0, %s106
      %s110 = sphi 0, %s109
      %s126 = sphi 0, %s110
      %s130 = sphi 0, %s130
      %s132 = sphi 0, %s130
      %s133 = sphi 0, %s132
      %s147 = sphi 0, %s133
      %s151 = sphi 0, %s151
      %s153 = sphi 0, %s151
      %s154 = sphi 0, %s153
      %s168 = sphi 0, %s154
      %s172 = sphi 0, %s172
      %s174 = sphi 0, %s172
      %s175 = sphi 0, %s174
      %s189 = sphi 0, %s175
      %s193 = sphi 0, %s193
      %s195 = sphi 0, %s193
      %s196 = sphi 0, %s195
      %s210 = sphi 0, %s196
      %s214 = sphi 0, %s214
      %s216 = sphi 0, %s214
      %s217 = sphi 0, %s216
      %s231 = sphi 0, %s217
      %s235 = sphi 0, %s235
      %s237 = sphi 0, %s235
      %s238 = sphi 0, %s237
      %s252 = sphi 0, %s238
      %s256 = sphi 0, %s256
      %s258 = sphi 0, %s256
      %s259 = sphi 0, %s258
      %s273 = sphi 0, %s259
      %s277 = sphi 0, %s277
      %s279 = sphi 0, %s277
      %s280 = sphi 0, %s279
      %s294 = sphi 0, %s280
      %s302 = sphi 0, %s304
      %s305 = sphi 0, %s302
      %s306 = sphi 0, %s305
      %s322 = sphi 0, %s306
    $region4: #{tpu_custom_call.1} parent=1 // loop_header_branch
      %33 = sbr.rel (%p31) target = $region8
    $region5: #{tpu_custom_call.1} parent=1 // loop_body
      %s35 = ssub.s32 %s30, 1
      %s36 = ssub.s32 %s30, 2
      %s43 = sadd.s32 1, %s38
      %p44 = scmp.ge.s32.totalorder %s43, 1
      %s45 = scalar_select %p44, 0, %s43
      %s46 = sadd.s32 1, %s37
      %s47 = scalar_select %p44, %s46, %s37
      %p48 = scmp.ge.s32.totalorder %s47, 2
      %s49 = scalar_select %p48, 0, %s47
      %s50 = ssub.s32 %s37, %s49
      %s51 = ssub.s32 %s38, %s45
      %s52 = sor.u32 %s50, %s51
      %p53 = scmp.eq.s32.totalorder %s52, 0
      %s55 = sadd.s32 %s54, 1
      %s56 = scalar_select %p53, %s54, %s55
      %p59 = pneg %p53
      %p60 = scmp.eq.s32.totalorder %s30, 1
      %p61 = por %p59, %p60
      %p62 = scmp.ne.s32.totalorder %s54, %s57
      %p63 = scmp.eq.s32.totalorder %s30, 0
      %p64 = por %p62, %p63
      %p65 = scmp.ne.s32.totalorder %s54, %s57
      %p66 = scmp.eq.s32.totalorder %s35, 1
      %p67 = por %p65, %p66
      %p68 = scmp.ne.s32.totalorder %s57, %s58
      %p69 = scmp.eq.s32.totalorder %s35, 0
      %p70 = por %p68, %p69
      %p71 = scmp.ne.s32.totalorder %s57, %s58
      %p72 = scmp.eq.s32.totalorder %s36, 1
      %p73 = por %p71, %p72
      %p75 = scmp.ne.s32.totalorder %s58, %s74
      %p76 = scmp.eq.s32.totalorder %s36, 0
      %p77 = por %p75, %p76
      %s78 = ssub.s32 %s37, %s49
      %p79 = scmp.eq.s32.totalorder %s78, 0
      %s81 = sadd.s32 %s80, 1
      %s82 = scalar_select %p79, %s80, %s81
      %p85 = pneg %p79
      %p86 = scmp.eq.s32.totalorder %s30, 1
      %p87 = por %p85, %p86
      %p88 = scmp.ne.s32.totalorder %s80, %s83
      %p89 = scmp.eq.s32.totalorder %s30, 0
      %p90 = por %p88, %p89
      %p91 = scmp.ne.s32.totalorder %s80, %s83
      %p92 = scmp.eq.s32.totalorder %s35, 1
      %p93 = por %p91, %p92
      %p94 = scmp.ne.s32.totalorder %s83, %s84
      %p95 = scmp.eq.s32.totalorder %s35, 0
      %p96 = por %p94, %p95
      %p97 = scmp.ne.s32.totalorder %s83, %s84
      %p98 = scmp.eq.s32.totalorder %s36, 1
      %p99 = por %p97, %p98
      %p101 = scmp.ne.s32.totalorder %s84, %s100
      %p102 = scmp.eq.s32.totalorder %s36, 0
      %p103 = por %p101, %p102
      %s104 = ssub.s32 %s37, %s49
      %p105 = scmp.eq.s32.totalorder %s104, 0
      %s107 = sadd.s32 %s106, 1
      %s108 = scalar_select %p105, %s106, %s107
      %p111 = pneg %p105
      %p112 = scmp.eq.s32.totalorder %s30, 1
      %p113 = por %p111, %p112
      %p114 = scmp.ne.s32.totalorder %s106, %s109
      %p115 = scmp.eq.s32.totalorder %s30, 0
      %p116 = por %p114, %p115
      %p117 = scmp.ne.s32.totalorder %s106, %s109
      %p118 = scmp.eq.s32.totalorder %s35, 1
      %p119 = por %p117, %p118
      %p120 = scmp.ne.s32.totalorder %s109, %s110
      %p121 = scmp.eq.s32.totalorder %s35, 0
      %p122 = por %p120, %p121
      %p123 = scmp.ne.s32.totalorder %s109, %s110
      %p124 = scmp.eq.s32.totalorder %s36, 1
      %p125 = por %p123, %p124
      %p127 = scmp.ne.s32.totalorder %s110, %s126
      %p128 = scmp.eq.s32.totalorder %s36, 0
      %p129 = por %p127, %p128
      %s131 = sadd.s32 %s130, 1
      %p134 = scmp.eq.s32.totalorder %s30, 1
      %p135 = scmp.ne.s32.totalorder %s130, %s132
      %p136 = scmp.eq.s32.totalorder %s30, 0
      %p137 = por %p135, %p136
      %p138 = scmp.ne.s32.totalorder %s130, %s132
      %p139 = scmp.eq.s32.totalorder %s35, 1
      %p140 = por %p138, %p139
      %p141 = scmp.ne.s32.totalorder %s132, %s133
      %p142 = scmp.eq.s32.totalorder %s35, 0
      %p143 = por %p141, %p142
      %p144 = scmp.ne.s32.totalorder %s132, %s133
      %p145 = scmp.eq.s32.totalorder %s36, 1
      %p146 = por %p144, %p145
      %p148 = scmp.ne.s32.totalorder %s133, %s147
      %p149 = scmp.eq.s32.totalorder %s36, 0
      %p150 = por %p148, %p149
      %s152 = sadd.s32 %s151, 1
      %p155 = scmp.eq.s32.totalorder %s30, 1
      %p156 = scmp.ne.s32.totalorder %s151, %s153
      %p157 = scmp.eq.s32.totalorder %s30, 0
      %p158 = por %p156, %p157
      %p159 = scmp.ne.s32.totalorder %s151, %s153
      %p160 = scmp.eq.s32.totalorder %s35, 1
      %p161 = por %p159, %p160
      %p162 = scmp.ne.s32.totalorder %s153, %s154
      %p163 = scmp.eq.s32.totalorder %s35, 0
      %p164 = por %p162, %p163
      %p165 = scmp.ne.s32.totalorder %s153, %s154
      %p166 = scmp.eq.s32.totalorder %s36, 1
      %p167 = por %p165, %p166
      %p169 = scmp.ne.s32.totalorder %s154, %s168
      %p170 = scmp.eq.s32.totalorder %s36, 0
      %p171 = por %p169, %p170
      %s173 = sadd.s32 %s172, 1
      %p176 = scmp.eq.s32.totalorder %s30, 1
      %p177 = scmp.ne.s32.totalorder %s172, %s174
      %p178 = scmp.eq.s32.totalorder %s30, 0
      %p179 = por %p177, %p178
      %p180 = scmp.ne.s32.totalorder %s172, %s174
      %p181 = scmp.eq.s32.totalorder %s35, 1
      %p182 = por %p180, %p181
      %p183 = scmp.ne.s32.totalorder %s174, %s175
      %p184 = scmp.eq.s32.totalorder %s35, 0
      %p185 = por %p183, %p184
      %p186 = scmp.ne.s32.totalorder %s174, %s175
      %p187 = scmp.eq.s32.totalorder %s36, 1
      %p188 = por %p186, %p187
      %p190 = scmp.ne.s32.totalorder %s175, %s189
      %p191 = scmp.eq.s32.totalorder %s36, 0
      %p192 = por %p190, %p191
      %s194 = sadd.s32 %s193, 1
      %p197 = scmp.eq.s32.totalorder %s30, 1
      %p198 = scmp.ne.s32.totalorder %s193, %s195
      %p199 = scmp.eq.s32.totalorder %s30, 0
      %p200 = por %p198, %p199
      %p201 = scmp.ne.s32.totalorder %s193, %s195
      %p202 = scmp.eq.s32.totalorder %s35, 1
      %p203 = por %p201, %p202
      %p204 = scmp.ne.s32.totalorder %s195, %s196
      %p205 = scmp.eq.s32.totalorder %s35, 0
      %p206 = por %p204, %p205
      %p207 = scmp.ne.s32.totalorder %s195, %s196
      %p208 = scmp.eq.s32.totalorder %s36, 1
      %p209 = por %p207, %p208
      %p211 = scmp.ne.s32.totalorder %s196, %s210
      %p212 = scmp.eq.s32.totalorder %s36, 0
      %p213 = por %p211, %p212
      %s215 = sadd.s32 %s214, 1
      %p218 = scmp.eq.s32.totalorder %s30, 1
      %p219 = scmp.ne.s32.totalorder %s214, %s216
      %p220 = scmp.eq.s32.totalorder %s30, 0
      %p221 = por %p219, %p220
      %p222 = scmp.ne.s32.totalorder %s214, %s216
      %p223 = scmp.eq.s32.totalorder %s35, 1
      %p224 = por %p222, %p223
      %p225 = scmp.ne.s32.totalorder %s216, %s217
      %p226 = scmp.eq.s32.totalorder %s35, 0
      %p227 = por %p225, %p226
      %p228 = scmp.ne.s32.totalorder %s216, %s217
      %p229 = scmp.eq.s32.totalorder %s36, 1
      %p230 = por %p228, %p229
      %p232 = scmp.ne.s32.totalorder %s217, %s231
      %p233 = scmp.eq.s32.totalorder %s36, 0
      %p234 = por %p232, %p233
      %s236 = sadd.s32 %s235, 1
      %p239 = scmp.eq.s32.totalorder %s30, 1
      %p240 = scmp.ne.s32.totalorder %s235, %s237
      %p241 = scmp.eq.s32.totalorder %s30, 0
      %p242 = por %p240, %p241
      %p243 = scmp.ne.s32.totalorder %s235, %s237
      %p244 = scmp.eq.s32.totalorder %s35, 1
      %p245 = por %p243, %p244
      %p246 = scmp.ne.s32.totalorder %s237, %s238
      %p247 = scmp.eq.s32.totalorder %s35, 0
      %p248 = por %p246, %p247
      %p249 = scmp.ne.s32.totalorder %s237, %s238
      %p250 = scmp.eq.s32.totalorder %s36, 1
      %p251 = por %p249, %p250
      %p253 = scmp.ne.s32.totalorder %s238, %s252
      %p254 = scmp.eq.s32.totalorder %s36, 0
      %p255 = por %p253, %p254
      %s257 = sadd.s32 %s256, 1
      %p260 = scmp.eq.s32.totalorder %s30, 1
      %p261 = scmp.ne.s32.totalorder %s256, %s258
      %p262 = scmp.eq.s32.totalorder %s30, 0
      %p263 = por %p261, %p262
      %p264 = scmp.ne.s32.totalorder %s256, %s258
      %p265 = scmp.eq.s32.totalorder %s35, 1
      %p266 = por %p264, %p265
      %p267 = scmp.ne.s32.totalorder %s258, %s259
      %p268 = scmp.eq.s32.totalorder %s35, 0
      %p269 = por %p267, %p268
      %p270 = scmp.ne.s32.totalorder %s258, %s259
      %p271 = scmp.eq.s32.totalorder %s36, 1
      %p272 = por %p270, %p271
      %p274 = scmp.ne.s32.totalorder %s259, %s273
      %p275 = scmp.eq.s32.totalorder %s36, 0
      %p276 = por %p274, %p275
      %s278 = sadd.s32 %s277, 1
      %p281 = scmp.eq.s32.totalorder %s30, 1
      %p282 = scmp.ne.s32.totalorder %s277, %s279
      %p283 = scmp.eq.s32.totalorder %s30, 0
      %p284 = por %p282, %p283
      %p285 = scmp.ne.s32.totalorder %s277, %s279
      %p286 = scmp.eq.s32.totalorder %s35, 1
      %p287 = por %p285, %p286
      %p288 = scmp.ne.s32.totalorder %s279, %s280
      %p289 = scmp.eq.s32.totalorder %s35, 0
      %p290 = por %p288, %p289
      %p291 = scmp.ne.s32.totalorder %s279, %s280
      %p292 = scmp.eq.s32.totalorder %s36, 1
      %p293 = por %p291, %p292
      %p295 = scmp.ne.s32.totalorder %s280, %s294
      %p296 = scmp.eq.s32.totalorder %s36, 0
      %p297 = por %p295, %p296
      %s298 = ssub.s32 %s37, %s49
      %s299 = ssub.s32 %s38, %s45
      %s300 = sor.u32 %s298, %s299
      %p301 = scmp.eq.s32.totalorder %s300, 0
      %s303 = sadd.s32 %s302, 1
      %s304 = scalar_select %p301, %s302, %s303
      %p307 = pneg %p301
      %p308 = scmp.eq.s32.totalorder %s30, 1
      %p309 = por %p307, %p308
      %p310 = scmp.ne.s32.totalorder %s302, %s305
      %p311 = scmp.eq.s32.totalorder %s30, 0
      %p312 = por %p310, %p311
      %p313 = scmp.ne.s32.totalorder %s302, %s305
      %p314 = scmp.eq.s32.totalorder %s35, 1
      %p315 = por %p313, %p314
      %p316 = scmp.ne.s32.totalorder %s305, %s306
      %p317 = scmp.eq.s32.totalorder %s35, 0
      %p318 = por %p316, %p317
      %p319 = scmp.ne.s32.totalorder %s305, %s306
      %p320 = scmp.eq.s32.totalorder %s36, 1
      %p321 = por %p319, %p320
      %p323 = scmp.ne.s32.totalorder %s306, %s322
      %p324 = scmp.eq.s32.totalorder %s36, 0
      %p325 = por %p323, %p324
      %p326 = scmp.le.s32.totalorder 1, %s30
      %p327 = scmp.lt.s32.totalorder %s30, 3
      %p328 = pnand %p326, %p327
      %p329 = pneg %p328
      // Predicated region
      $region9: #{tpu_custom_call.1} parent=5 // pred_check
        _
      $region10: #{tpu_custom_call.1} parent=5 // pred_check_branch
        %331 = sbr.rel (%p328) target = $region12
      $region11: #{tpu_custom_call.1} parent=5 // pred_region
        %s332 = ssub.s32 %s30, 1
        // Predicated region
        $region13: #{tpu_custom_call.1} parent=11 // pred_check
          %p333 = pneg %p143
        $region14: #{tpu_custom_call.1} parent=11 // pred_check_branch
          %335 = sbr.rel (%p333) target = $region16
        $region15: #{tpu_custom_call.1} parent=11 // pred_region
          %s337 = ssub.s32 256, 256
          %338 = vsyncadd [#allocation11], %s337
          %s339 = sshll.u32 [#allocation10], 4
          %s340 = int_to_ptr.vmem [resolvable:$true] %s339
          %345 = dma.hbm_to_vmem [thread:$0]  %s3, 256, %s340, [#allocation11], 64, 64, 4
        $region16: #{tpu_custom_call.1} parent=11 // pred_fallthru
          _
        // Predicated region
        $region17: #{tpu_custom_call.1} parent=11 // pred_check
          %p346 = pneg %p164
        $region18: #{tpu_custom_call.1} parent=11 // pred_check_branch
          %348 = sbr.rel (%p346) target = $region20
        $region19: #{tpu_custom_call.1} parent=11 // pred_region
          %s350 = ssub.s32 16, 16
          %351 = vsyncadd [#allocation11], %s350
          %s353 = sshll.u32 [#allocation12], 4
          %s354 = int_to_ptr.vmem [resolvable:$true] %s353
          %356 = dma.hbm_to_vmem [thread:$0]  %s4, 16, %s354, [#allocation11]
        $region20: #{tpu_custom_call.1} parent=11 // pred_fallthru
          _
        // Predicated region
        $region21: #{tpu_custom_call.1} parent=11 // pred_check
          %p357 = pneg %p185
        $region22: #{tpu_custom_call.1} parent=11 // pred_check_branch
          %359 = sbr.rel (%p357) target = $region24
        $region23: #{tpu_custom_call.1} parent=11 // pred_region
          %s361 = ssub.s32 256, 256
          %362 = vsyncadd [#allocation14], %s361
          %s363 = sshll.u32 [#allocation13], 4
          %s364 = int_to_ptr.vmem [resolvable:$true] %s363
          %369 = dma.hbm_to_vmem [thread:$0]  %s5, 256, %s364, [#allocation14], 64, 64, 4
        $region24: #{tpu_custom_call.1} parent=11 // pred_fallthru
          _
        // Predicated region
        $region25: #{tpu_custom_call.1} parent=11 // pred_check
          %p370 = pneg %p206
        $region26: #{tpu_custom_call.1} parent=11 // pred_check_branch
          %372 = sbr.rel (%p370) target = $region28
        $region27: #{tpu_custom_call.1} parent=11 // pred_region
          %s374 = ssub.s32 16, 16
          %375 = vsyncadd [#allocation14], %s374
          %s377 = sshll.u32 [#allocation15], 4
          %s378 = int_to_ptr.vmem [resolvable:$true] %s377
          %380 = dma.hbm_to_vmem [thread:$0]  %s6, 16, %s378, [#allocation14]
        $region28: #{tpu_custom_call.1} parent=11 // pred_fallthru
          _
        // Predicated region
        $region29: #{tpu_custom_call.1} parent=11 // pred_check
          %p381 = pneg %p227
        $region30: #{tpu_custom_call.1} parent=11 // pred_check_branch
          %383 = sbr.rel (%p381) target = $region32
        $region31: #{tpu_custom_call.1} parent=11 // pred_region
          %s385 = ssub.s32 256, 256
          %386 = vsyncadd [#allocation17], %s385
          %s387 = sshll.u32 [#allocation16], 4
          %s388 = int_to_ptr.vmem [resolvable:$true] %s387
          %393 = dma.hbm_to_vmem [thread:$0]  %s7, 256, %s388, [#allocation17], 64, 64, 4
        $region32: #{tpu_custom_call.1} parent=11 // pred_fallthru
          _
        // Predicated region
        $region33: #{tpu_custom_call.1} parent=11 // pred_check
          %p394 = pneg %p248
        $region34: #{tpu_custom_call.1} parent=11 // pred_check_branch
          %396 = sbr.rel (%p394) target = $region36
        $region35: #{tpu_custom_call.1} parent=11 // pred_region
          %s398 = ssub.s32 16, 16
          %399 = vsyncadd [#allocation17], %s398
          %s401 = sshll.u32 [#allocation18], 4
          %s402 = int_to_ptr.vmem [resolvable:$true] %s401
          %404 = dma.hbm_to_vmem [thread:$0]  %s8, 16, %s402, [#allocation17]
        $region36: #{tpu_custom_call.1} parent=11 // pred_fallthru
          _
        // Predicated region
        $region37: #{tpu_custom_call.1} parent=11 // pred_check
          %p405 = pneg %p269
        $region38: #{tpu_custom_call.1} parent=11 // pred_check_branch
          %407 = sbr.rel (%p405) target = $region40
        $region39: #{tpu_custom_call.1} parent=11 // pred_region
          %s409 = ssub.s32 256, 256
          %410 = vsyncadd [#allocation20], %s409
          %s411 = sshll.u32 [#allocation19], 4
          %s412 = int_to_ptr.vmem [resolvable:$true] %s411
          %417 = dma.hbm_to_vmem [thread:$0]  %s9, 256, %s412, [#allocation20], 64, 64, 4
        $region40: #{tpu_custom_call.1} parent=11 // pred_fallthru
          _
        // Predicated region
        $region41: #{tpu_custom_call.1} parent=11 // pred_check
          %p418 = pneg %p290
        $region42: #{tpu_custom_call.1} parent=11 // pred_check_branch
          %420 = sbr.rel (%p418) target = $region44
        $region43: #{tpu_custom_call.1} parent=11 // pred_region
          %s422 = ssub.s32 16, 16
          %423 = vsyncadd [#allocation20], %s422
          %s425 = sshll.u32 [#allocation21], 4
          %s426 = int_to_ptr.vmem [resolvable:$true] %s425
          %428 = dma.hbm_to_vmem [thread:$0]  %s10, 16, %s426, [#allocation20]
        $region44: #{tpu_custom_call.1} parent=11 // pred_fallthru
          _
      $region12: #{tpu_custom_call.1} parent=5 // pred_fallthru
        _
      %p429 = scmp.lt.s32.totalorder %s30, 2
      // Predicated region
      $region45: #{tpu_custom_call.1} parent=5 // pred_check
        %p430 = pneg %p429
      $region46: #{tpu_custom_call.1} parent=5 // pred_check_branch
        %432 = sbr.rel (%p430) target = $region48
      $region47: #{tpu_custom_call.1} parent=5 // pred_region
        // Predicated region
        $region49: #{tpu_custom_call.1} parent=47 // pred_check
          %p433 = pneg %p64
        $region50: #{tpu_custom_call.1} parent=47 // pred_check_branch
          %435 = sbr.rel (%p433) target = $region52
        $region51: #{tpu_custom_call.1} parent=47 // pred_region
          %s436 = sand.u32 %s54, 1
          %s437 = scalar_lea.sflag [#allocation5], %s436
          %s438 = sand.u32 %s54, 1
          %s439 = smul.addr %s438, 8
          %s440 = scalar_lea.vmem [#allocation4], %s439
          %s442 = ssub.s32 128, 128
          %443 = vsyncadd %s437, %s442
          %s444 = sadd.s32 %s38, %s37
          %s445 = smul.addr %s444, 128
          %s446 = scalar_lea.hbm %s0, %s445
          %s448 = sshll.u32 %s440, 4
          %s449 = int_to_ptr.vmem [resolvable:$true] %s448
          %451 = dma.hbm_to_vmem [thread:$0]  %s446, 128, %s449, %s437
        $region52: #{tpu_custom_call.1} parent=47 // pred_fallthru
          _
        // Predicated region
        $region53: #{tpu_custom_call.1} parent=47 // pred_check
          %p452 = pneg %p90
        $region54: #{tpu_custom_call.1} parent=47 // pred_check_branch
          %454 = sbr.rel (%p452) target = $region56
        $region55: #{tpu_custom_call.1} parent=47 // pred_region
          %s455 = sand.u32 %s30, 1
          %s456 = scalar_lea.sflag [#allocation8], %s455
          %s457 = sand.u32 %s80, 1
          %s458 = smul.addr %s457, 8
          %s459 = scalar_lea.vmem [#allocation7], %s458
          %s461 = ssub.s32 128, 128
          %462 = vsyncadd %s456, %s461
          %s463 = smul.addr %s37, 128
          %s464 = scalar_lea.hbm %s1, %s463
          %s466 = sshll.u32 %s459, 4
          %s467 = int_to_ptr.vmem [resolvable:$true] %s466
          %469 = dma.hbm_to_vmem [thread:$0]  %s464, 128, %s467, %s456
        $region56: #{tpu_custom_call.1} parent=47 // pred_fallthru
          _
        // Predicated region
        $region57: #{tpu_custom_call.1} parent=47 // pred_check
          %p470 = pneg %p116
        $region58: #{tpu_custom_call.1} parent=47 // pred_check_branch
          %472 = sbr.rel (%p470) target = $region60
        $region59: #{tpu_custom_call.1} parent=47 // pred_region
          %s473 = sand.u32 %s30, 1
          %s474 = scalar_lea.sflag [#allocation8], %s473
          %s475 = sand.u32 %s106, 1
          %s476 = smul.addr %s475, 8
          %s477 = scalar_lea.vmem [#allocation9], %s476
          %s479 = ssub.s32 128, 128
          %480 = vsyncadd %s474, %s479
          %s481 = smul.addr %s37, 128
          %s482 = scalar_lea.hbm %s2, %s481
          %s484 = sshll.u32 %s477, 4
          %s485 = int_to_ptr.vmem [resolvable:$true] %s484
          %487 = dma.hbm_to_vmem [thread:$0]  %s482, 128, %s485, %s474
        $region60: #{tpu_custom_call.1} parent=47 // pred_fallthru
          _
      $region48: #{tpu_custom_call.1} parent=5 // pred_fallthru
        _
      %p488 = scmp.le.s32.totalorder 1, %s30
      %p489 = scmp.lt.s32.totalorder %s30, 3
      %p490 = pnand %p488, %p489
      %p491 = pneg %p490
      // Predicated region
      $region61: #{tpu_custom_call.1} parent=5 // pred_check
        _
      $region62: #{tpu_custom_call.1} parent=5 // pred_check_branch
        %493 = sbr.rel (%p490) target = $region64
      $region63: #{tpu_custom_call.1} parent=5 // pred_region
        %s494 = ssub.s32 %s30, 1
        %s495 = sand.u32 %s57, 1
        %s496 = scalar_lea.sflag [#allocation5], %s495
        %s497 = sand.u32 %s57, 1
        %s498 = smul.addr %s497, 8
        %s499 = scalar_lea.vmem [#allocation4], %s498
        // Predicated region
        $region65: #{tpu_custom_call.1} parent=63 // pred_check
          %p500 = pneg %p70
        $region66: #{tpu_custom_call.1} parent=63 // pred_check_branch
          %502 = sbr.rel (%p500) target = $region68
        $region67: #{tpu_custom_call.1} parent=63 // pred_region
          %503 = dma.done %s496, 128
        $region68: #{tpu_custom_call.1} parent=63 // pred_fallthru
          _
        %s504 = sand.u32 %s35, 1
        %s505 = scalar_lea.sflag [#allocation8], %s504
        %s506 = sand.u32 %s83, 1
        %s507 = smul.addr %s506, 8
        %s508 = scalar_lea.vmem [#allocation7], %s507
        // Predicated region
        $region69: #{tpu_custom_call.1} parent=63 // pred_check
          %p509 = pneg %p96
        $region70: #{tpu_custom_call.1} parent=63 // pred_check_branch
          %511 = sbr.rel (%p509) target = $region72
        $region71: #{tpu_custom_call.1} parent=63 // pred_region
          %512 = dma.done %s505, 128
        $region72: #{tpu_custom_call.1} parent=63 // pred_fallthru
          _
        %s513 = sand.u32 %s35, 1
        %s514 = scalar_lea.sflag [#allocation8], %s513
        %s515 = sand.u32 %s109, 1
        %s516 = smul.addr %s515, 8
        %s517 = scalar_lea.vmem [#allocation9], %s516
        // Predicated region
        $region73: #{tpu_custom_call.1} parent=63 // pred_check
          %p518 = pneg %p122
        $region74: #{tpu_custom_call.1} parent=63 // pred_check_branch
          %520 = sbr.rel (%p518) target = $region76
        $region75: #{tpu_custom_call.1} parent=63 // pred_region
          %521 = dma.done %s514, 128
        $region76: #{tpu_custom_call.1} parent=63 // pred_fallthru
          _
        // Predicated region
        $region77: #{tpu_custom_call.1} parent=63 // pred_check
          %p522 = pneg %p143
        $region78: #{tpu_custom_call.1} parent=63 // pred_check_branch
          %524 = sbr.rel (%p522) target = $region80
        $region79: #{tpu_custom_call.1} parent=63 // pred_region
          %525 = dma.done [#allocation11], 256
        $region80: #{tpu_custom_call.1} parent=63 // pred_fallthru
          _
        // Predicated region
        $region81: #{tpu_custom_call.1} parent=63 // pred_check
          %p526 = pneg %p164
        $region82: #{tpu_custom_call.1} parent=63 // pred_check_branch
          %528 = sbr.rel (%p526) target = $region84
        $region83: #{tpu_custom_call.1} parent=63 // pred_region
          %529 = dma.done [#allocation11], 16
        $region84: #{tpu_custom_call.1} parent=63 // pred_fallthru
          _
        // Predicated region
        $region85: #{tpu_custom_call.1} parent=63 // pred_check
          %p530 = pneg %p185
        $region86: #{tpu_custom_call.1} parent=63 // pred_check_branch
          %532 = sbr.rel (%p530) target = $region88
        $region87: #{tpu_custom_call.1} parent=63 // pred_region
          %533 = dma.done [#allocation14], 256
        $region88: #{tpu_custom_call.1} parent=63 // pred_fallthru
          _
        // Predicated region
        $region89: #{tpu_custom_call.1} parent=63 // pred_check
          %p534 = pneg %p206
        $region90: #{tpu_custom_call.1} parent=63 // pred_check_branch
          %536 = sbr.rel (%p534) target = $region92
        $region91: #{tpu_custom_call.1} parent=63 // pred_region
          %537 = dma.done [#allocation14], 16
        $region92: #{tpu_custom_call.1} parent=63 // pred_fallthru
          _
        // Predicated region
        $region93: #{tpu_custom_call.1} parent=63 // pred_check
          %p538 = pneg %p227
        $region94: #{tpu_custom_call.1} parent=63 // pred_check_branch
          %540 = sbr.rel (%p538) target = $region96
        $region95: #{tpu_custom_call.1} parent=63 // pred_region
          %541 = dma.done [#allocation17], 256
        $region96: #{tpu_custom_call.1} parent=63 // pred_fallthru
          _
        // Predicated region
        $region97: #{tpu_custom_call.1} parent=63 // pred_check
          %p542 = pneg %p248
        $region98: #{tpu_custom_call.1} parent=63 // pred_check_branch
          %544 = sbr.rel (%p542) target = $region100
        $region99: #{tpu_custom_call.1} parent=63 // pred_region
          %545 = dma.done [#allocation17], 16
        $region100: #{tpu_custom_call.1} parent=63 // pred_fallthru
          _
        // Predicated region
        $region101: #{tpu_custom_call.1} parent=63 // pred_check
          %p546 = pneg %p269
        $region102: #{tpu_custom_call.1} parent=63 // pred_check_branch
          %548 = sbr.rel (%p546) target = $region104
        $region103: #{tpu_custom_call.1} parent=63 // pred_region
          %549 = dma.done [#allocation20], 256
        $region104: #{tpu_custom_call.1} parent=63 // pred_fallthru
          _
        // Predicated region
        $region105: #{tpu_custom_call.1} parent=63 // pred_check
          %p550 = pneg %p290
        $region106: #{tpu_custom_call.1} parent=63 // pred_check_branch
          %552 = sbr.rel (%p550) target = $region108
        $region107: #{tpu_custom_call.1} parent=63 // pred_region
          %553 = dma.done [#allocation20], 16
        $region108: #{tpu_custom_call.1} parent=63 // pred_fallthru
          _
        %s554 = sand.u32 %s57, 1
        %s555 = scalar_lea.sflag [#allocation5], %s554
        %s556 = sand.u32 %s57, 1
        %s557 = smul.addr %s556, 8
        %s558 = scalar_lea.vmem [#allocation4], %s557
        %p559 = pneg %p70
        %p560 = pneg %p67
        %s561 = sand.u32 %s35, 1
        %s562 = scalar_lea.sflag [#allocation8], %s561
        %s563 = sand.u32 %s83, 1
        %s564 = smul.addr %s563, 8
        %s565 = scalar_lea.vmem [#allocation7], %s564
        %p566 = pneg %p96
        %p567 = pneg %p93
        %s568 = sand.u32 %s35, 1
        %s569 = scalar_lea.sflag [#allocation8], %s568
        %s570 = sand.u32 %s109, 1
        %s571 = smul.addr %s570, 8
        %s572 = scalar_lea.vmem [#allocation9], %s571
        %p573 = pneg %p122
        %p574 = pneg %p119
        %p575 = pneg %p143
        %p576 = pneg %p140
        %p577 = pneg %p164
        %p578 = pneg %p161
        %p579 = pneg %p185
        %p580 = pneg %p182
        %p581 = pneg %p206
        %p582 = pneg %p203
        %p583 = pneg %p227
        %p584 = pneg %p224
        %p585 = pneg %p248
        %p586 = pneg %p245
        %p587 = pneg %p269
        %p588 = pneg %p266
        %p589 = pneg %p290
        %p590 = pneg %p287
        %p591 = pneg %p318
        %p592 = pneg %p315
        %s593 = sand.u32 %s305, 1
        %s594 = scalar_lea.sflag [#allocation6], %s593
        %s595 = sand.u32 %s305, 1
        %s596 = smul.addr %s595, 8
        %s597 = scalar_lea.vmem [#allocation22], %s596
        %p599 = scmp.eq.s32.totalorder %s40, 0
        // Predicated region
        $region109: #{tpu_custom_call.1} parent=63 // pred_check
          %p600 = pneg %p599
        $region110: #{tpu_custom_call.1} parent=63 // pred_check_branch
          %602 = sbr.rel (%p600) target = $region112
        $region111: #{tpu_custom_call.1} parent=63 // pred_region
          %v603 = vld [vmem:[%s508] sm:$0xff]
          %v604 = vpack.c.bf16 %v603, %v603
          %v605 = vld [vmem:[%s517] sm:$0xff]
          %v606 = vpack.c.bf16 %v605, %v605
          %v607 = vld [vmem:[#allocation13] sm:$0xf]
          %v608 = vld [vmem:[#allocation13 + $0x4] sm:$0xf]
          %v609 = vld [vmem:[#allocation13 + $0x8] sm:$0xf]
          %v610 = vld [vmem:[#allocation13 + $0xc] sm:$0xf]
          %v611 = vld [vmem:[#allocation15] sm:$0x1]
          %v613 = vlaneseq
          %v614 = vshrl.u32 %v613, 7
          %v615 = vsub.s32 0, %v614
          %v616 = vrot.slane %v611, %v615
          %v622 = vunpack.c.l.b16 %v607
          %v623 = vunpack.c.l.b16 %v608
          %v624 = vunpack.c.l.b16 %v609
          %v625 = vunpack.c.l.b16 %v610
          %v626 = vpack.c.b16 %v623, %v622
          %v627 = vpack.c.b16 %v625, %v624
          %vm630 = vcmask 261120
          %v632 = vsel %vm630, %v604, 0
          %634 = vmatprep.subr.bf16.mxu0 0
          %635 = vmatpush1.bf16.msra.mxu0 %v626
          %636 = vmatprep.subr.bf16.mxu0 0
          %637 = vmatpush1.bf16.msra.mxu0 %v627
          %638 = vmatprep.subr.bf16.mxu0 0
          %639 = vmatpush1.bf16.msra.mxu0 0
          %640 = vmatprep.subr.bf16.mxu0 0
          %641 = vmatpush1.bf16.msra.mxu0 0
          %642 = vmatprep.subr.bf16.mxu0 0
          %643 = vmatpush1.bf16.msra.mxu0 0
          %644 = vmatprep.subr.bf16.mxu0 0
          %645 = vmatpush1.bf16.msra.mxu0 0
          %646 = vmatprep.subr.bf16.mxu0 0
          %647 = vmatpush1.bf16.msra.mxu0 0
          %648 = vmatprep.subr.bf16.mxu0 0
          %649 = vmatpush1.bf16.msra.mxu0 0
          %650 = vmatprep.subr.bf16.mxu0 0
          %651 = vmatpush1.bf16.msra.mxu0 0
          %652 = vmatprep.subr.bf16.mxu0 0
          %653 = vmatpush1.bf16.msra.mxu0 0
          %654 = vmatprep.subr.bf16.mxu0 0
          %655 = vmatpush1.bf16.msra.mxu0 0
          %656 = vmatprep.subr.bf16.mxu0 0
          %657 = vmatpush1.bf16.msra.mxu0 0
          %658 = vmatprep.subr.bf16.mxu0 0
          %659 = vmatpush1.bf16.msra.mxu0 0
          %660 = vmatprep.subr.bf16.mxu0 0
          %661 = vmatpush1.bf16.msra.mxu0 0
          %662 = vmatprep.subr.bf16.mxu0 0
          %663 = vmatpush1.bf16.msra.mxu0 0
          %664 = vmatprep.subr.bf16.mxu0 0
          %665 = vmatpush1.bf16.msra.mxu0 0
          %666 = vmatprep.mubr.bf16.mxu0 0
          %667 = vmatmul.mubr.bf16.gmra.mrb[0].mxu0 %v632
          %v668 = vpop.f32.mrb[0].mxu0
          %v669 = vadd.f32 %v616, %v668
          %v670 = vpop.f32.mrb[0].mxu0
          %v671 = vpop.f32.mrb[0].mxu0
          %v672 = vpop.f32.mrb[0].mxu0
          %673 = vdwg.mxu0
          %v674 = vpack.c.bf16 %v669, %v669
          %vm675 = vcmask 257024
          %676 = vst.msk [vmem:[#allocation2] sm:$0xf] %vm675, %v674
          %v677 = vld [vmem:[#allocation16] sm:$0xf]
          %v678 = vld [vmem:[#allocation16 + $0x4] sm:$0xf]
          %v679 = vld [vmem:[#allocation16 + $0x8] sm:$0xf]
          %v680 = vld [vmem:[#allocation16 + $0xc] sm:$0xf]
          %v681 = vld [vmem:[#allocation18] sm:$0x1]
          %v683 = vlaneseq
          %v684 = vshrl.u32 %v683, 7
          %v685 = vsub.s32 0, %v684
          %v686 = vrot.slane %v681, %v685
          %v692 = vunpack.c.l.b16 %v677
          %v693 = vunpack.c.l.b16 %v678
          %v694 = vunpack.c.l.b16 %v679
          %v695 = vunpack.c.l.b16 %v680
          %v696 = vpack.c.b16 %v693, %v692
          %v697 = vpack.c.b16 %v695, %v694
          %v701 = vsel %vm630, %v606, 0
          %703 = vmatprep.subr.bf16.mxu0 0
          %704 = vmatpush1.bf16.msra.mxu0 %v696
          %705 = vmatprep.subr.bf16.mxu0 0
          %706 = vmatpush1.bf16.msra.mxu0 %v697
          %707 = vmatprep.subr.bf16.mxu0 0
          %708 = vmatpush1.bf16.msra.mxu0 0
          %709 = vmatprep.subr.bf16.mxu0 0
          %710 = vmatpush1.bf16.msra.mxu0 0
          %711 = vmatprep.subr.bf16.mxu0 0
          %712 = vmatpush1.bf16.msra.mxu0 0
          %713 = vmatprep.subr.bf16.mxu0 0
          %714 = vmatpush1.bf16.msra.mxu0 0
          %715 = vmatprep.subr.bf16.mxu0 0
          %716 = vmatpush1.bf16.msra.mxu0 0
          %717 = vmatprep.subr.bf16.mxu0 0
          %718 = vmatpush1.bf16.msra.mxu0 0
          %719 = vmatprep.subr.bf16.mxu0 0
          %720 = vmatpush1.bf16.msra.mxu0 0
          %721 = vmatprep.subr.bf16.mxu0 0
          %722 = vmatpush1.bf16.msra.mxu0 0
          %723 = vmatprep.subr.bf16.mxu0 0
          %724 = vmatpush1.bf16.msra.mxu0 0
          %725 = vmatprep.subr.bf16.mxu0 0
          %726 = vmatpush1.bf16.msra.mxu0 0
          %727 = vmatprep.subr.bf16.mxu0 0
          %728 = vmatpush1.bf16.msra.mxu0 0
          %729 = vmatprep.subr.bf16.mxu0 0
          %730 = vmatpush1.bf16.msra.mxu0 0
          %731 = vmatprep.subr.bf16.mxu0 0
          %732 = vmatpush1.bf16.msra.mxu0 0
          %733 = vmatprep.subr.bf16.mxu0 0
          %734 = vmatpush1.bf16.msra.mxu0 0
          %735 = vmatprep.mubr.bf16.mxu0 0
          %736 = vmatmul.mubr.bf16.gmra.mrb[0].mxu0 %v701
          %v737 = vpop.f32.mrb[0].mxu0
          %v738 = vadd.f32 %v686, %v737
          %v739 = vpop.f32.mrb[0].mxu0
          %v740 = vpop.f32.mrb[0].mxu0
          %v741 = vpop.f32.mrb[0].mxu0
          %742 = vdwg.mxu0
          %v743 = vpack.c.bf16 %v738, %v738
          %744 = vst.msk [vmem:[#allocation3] sm:$0xf] %vm675, %v743
        $region112: #{tpu_custom_call.1} parent=63 // pred_fallthru
          _
        %v745 = vld [vmem:[%s499] sm:$0xff]
        %v746 = vpack.c.bf16 %v745, %v745
        %v747 = vld [vmem:[#allocation10] sm:$0xf]
        %v748 = vld [vmem:[#allocation10 + $0x4] sm:$0xf]
        %v749 = vld [vmem:[#allocation10 + $0x8] sm:$0xf]
        %v750 = vld [vmem:[#allocation10 + $0xc] sm:$0xf]
        %v751 = vld [vmem:[#allocation12] sm:$0x1]
        %v753 = vlaneseq
        %v754 = vshrl.u32 %v753, 7
        %v755 = vsub.s32 0, %v754
        %v756 = vrot.slane %v751, %v755
        %v762 = vunpack.c.l.b16 %v747
        %v763 = vunpack.c.l.b16 %v748
        %v764 = vunpack.c.l.b16 %v749
        %v765 = vunpack.c.l.b16 %v750
        %v766 = vpack.c.b16 %v763, %v762
        %v767 = vpack.c.b16 %v765, %v764
        %vm770 = vcmask 261120
        %v772 = vsel %vm770, %v746, 0
        %774 = vmatprep.subr.bf16.mxu0 0
        %775 = vmatpush1.bf16.msra.mxu0 %v766
        %776 = vmatprep.subr.bf16.mxu0 0
        %777 = vmatpush1.bf16.msra.mxu0 %v767
        %778 = vmatprep.subr.bf16.mxu0 0
        %779 = vmatpush1.bf16.msra.mxu0 0
        %780 = vmatprep.subr.bf16.mxu0 0
        %781 = vmatpush1.bf16.msra.mxu0 0
        %782 = vmatprep.subr.bf16.mxu0 0
        %783 = vmatpush1.bf16.msra.mxu0 0
        %784 = vmatprep.subr.bf16.mxu0 0
        %785 = vmatpush1.bf16.msra.mxu0 0
        %786 = vmatprep.subr.bf16.mxu0 0
        %787 = vmatpush1.bf16.msra.mxu0 0
        %788 = vmatprep.subr.bf16.mxu0 0
        %789 = vmatpush1.bf16.msra.mxu0 0
        %790 = vmatprep.subr.bf16.mxu0 0
        %791 = vmatpush1.bf16.msra.mxu0 0
        %792 = vmatprep.subr.bf16.mxu0 0
        %793 = vmatpush1.bf16.msra.mxu0 0
        %794 = vmatprep.subr.bf16.mxu0 0
        %795 = vmatpush1.bf16.msra.mxu0 0
        %796 = vmatprep.subr.bf16.mxu0 0
        %797 = vmatpush1.bf16.msra.mxu0 0
        %798 = vmatprep.subr.bf16.mxu0 0
        %799 = vmatpush1.bf16.msra.mxu0 0
        %800 = vmatprep.subr.bf16.mxu0 0
        %801 = vmatpush1.bf16.msra.mxu0 0
        %802 = vmatprep.subr.bf16.mxu0 0
        %803 = vmatpush1.bf16.msra.mxu0 0
        %804 = vmatprep.subr.bf16.mxu0 0
        %805 = vmatpush1.bf16.msra.mxu0 0
        %806 = vmatprep.mubr.bf16.mxu0 0
        %807 = vmatmul.mubr.bf16.gmra.mrb[0].mxu0 %v772
        %v808 = vpop.f32.mrb[0].mxu0
        %v809 = vadd.f32 %v756, %v808
        %v810 = vpop.f32.mrb[0].mxu0
        %v811 = vpop.f32.mrb[0].mxu0
        %v812 = vpop.f32.mrb[0].mxu0
        %813 = vdwg.mxu0
        %v814 = vpack.c.bf16 %v809, %v809
        %v815 = vld [vmem:[#allocation2] sm:$0xf]
        %v816 = vld [vmem:[#allocation3] sm:$0xf]
        %vm817 = vcmask 64512
        %v819 = vsel %vm817, %v814, 0
        %v822 = vsel %vm817, %v815, 0
        %824 = vmatprep.subr.bf16.mxu0 0
        %825 = vmatpush1.bf16.xpose.msra.mxu0 %v822
        %826 = vmatprep.subr.bf16.mxu0 0
        %827 = vmatpush1.bf16.xpose.msra.mxu0 0
        %828 = vmatprep.subr.bf16.mxu0 0
        %829 = vmatpush1.bf16.xpose.msra.mxu0 0
        %830 = vmatprep.subr.bf16.mxu0 0
        %831 = vmatpush1.bf16.xpose.msra.mxu0 0
        %832 = vmatprep.subr.bf16.mxu0 0
        %833 = vmatpush1.bf16.xpose.msra.mxu0 0
        %834 = vmatprep.subr.bf16.mxu0 0
        %835 = vmatpush1.bf16.xpose.msra.mxu0 0
        %836 = vmatprep.subr.bf16.mxu0 0
        %837 = vmatpush1.bf16.xpose.msra.mxu0 0
        %838 = vmatprep.subr.bf16.mxu0 0
        %839 = vmatpush1.bf16.xpose.msra.mxu0 0
        %840 = vmatprep.subr.bf16.mxu0 0
        %841 = vmatpush1.bf16.xpose.msra.mxu0 0
        %842 = vmatprep.subr.bf16.mxu0 0
        %843 = vmatpush1.bf16.xpose.msra.mxu0 0
        %844 = vmatprep.subr.bf16.mxu0 0
        %845 = vmatpush1.bf16.xpose.msra.mxu0 0
        %846 = vmatprep.subr.bf16.mxu0 0
        %847 = vmatpush1.bf16.xpose.msra.mxu0 0
        %848 = vmatprep.subr.bf16.mxu0 0
        %849 = vmatpush1.bf16.xpose.msra.mxu0 0
        %850 = vmatprep.subr.bf16.mxu0 0
        %851 = vmatpush1.bf16.xpose.msra.mxu0 0
        %852 = vmatprep.subr.bf16.mxu0 0
        %853 = vmatpush1.bf16.xpose.msra.mxu0 0
        %854 = vmatprep.subr.bf16.mxu0 0
        %855 = vmatpush1.bf16.xpose.msra.mxu0 0
        %856 = vmatprep.mubr.bf16.mxu0 0
        %857 = vmatmul.mubr.bf16.gmra.mrb[0].mxu0 %v819
        %v858 = vpop.f32.mrb[0].mxu0
        %v859 = vadd.f32 0.0, %v858
        %v860 = vpop.f32.mrb[0].mxu0
        %v861 = vpop.f32.mrb[0].mxu0
        %v862 = vpop.f32.mrb[0].mxu0
        %863 = vdwg.mxu0
        %v864 = vsel %vm817, %v859, -inf
        %865 = vmax.xlane.f32.xlu0 %v864
        %v866 = vpop.xlane.xlu0 %865
        %v867 = vsub.f32 %v859, %v866
        %v868 = vmul.f32 %v867, 1.442695
        %v869 = vpow.pop %v868
        %v870 = vsel %vm817, %v869, 0.0
        %871 = vadd.xlane.f32.xlu0 %v870
        %v872 = vpop.xlane.xlu0 %871
        %v873 = vrcp.pop %v872
        %v874 = vmul.f32 %v869, %v873
        %v875 = vpack.c.bf16 %v874, %v874
        %v877 = vsel %vm817, %v875, 0
        %vm879 = vcmask 1043456
        %v881 = vsel %vm879, %v816, 0
        %883 = vmatprep.subr.bf16.mxu0 0
        %884 = vmatpush1.bf16.msra.mxu0 %v881
        %885 = vmatprep.subr.bf16.mxu0 0
        %886 = vmatpush1.bf16.msra.mxu0 0
        %887 = vmatprep.subr.bf16.mxu0 0
        %888 = vmatpush1.bf16.msra.mxu0 0
        %889 = vmatprep.subr.bf16.mxu0 0
        %890 = vmatpush1.bf16.msra.mxu0 0
        %891 = vmatprep.subr.bf16.mxu0 0
        %892 = vmatpush1.bf16.msra.mxu0 0
        %893 = vmatprep.subr.bf16.mxu0 0
        %894 = vmatpush1.bf16.msra.mxu0 0
        %895 = vmatprep.subr.bf16.mxu0 0
        %896 = vmatpush1.bf16.msra.mxu0 0
        %897 = vmatprep.subr.bf16.mxu0 0
        %898 = vmatpush1.bf16.msra.mxu0 0
        %899 = vmatprep.subr.bf16.mxu0 0
        %900 = vmatpush1.bf16.msra.mxu0 0
        %901 = vmatprep.subr.bf16.mxu0 0
        %902 = vmatpush1.bf16.msra.mxu0 0
        %903 = vmatprep.subr.bf16.mxu0 0
        %904 = vmatpush1.bf16.msra.mxu0 0
        %905 = vmatprep.subr.bf16.mxu0 0
        %906 = vmatpush1.bf16.msra.mxu0 0
        %907 = vmatprep.subr.bf16.mxu0 0
        %908 = vmatpush1.bf16.msra.mxu0 0
        %909 = vmatprep.subr.bf16.mxu0 0
        %910 = vmatpush1.bf16.msra.mxu0 0
        %911 = vmatprep.subr.bf16.mxu0 0
        %912 = vmatpush1.bf16.msra.mxu0 0
        %913 = vmatprep.subr.bf16.mxu0 0
        %914 = vmatpush1.bf16.msra.mxu0 0
        %915 = vmatprep.mubr.bf16.mxu0 0
        %916 = vmatmul.mubr.bf16.gmra.mrb[0].mxu0 %v877
        %v917 = vpop.f32.mrb[0].mxu0
        %v918 = vadd.f32 0.0, %v917
        %v919 = vpop.f32.mrb[0].mxu0
        %v920 = vpop.f32.mrb[0].mxu0
        %v921 = vpop.f32.mrb[0].mxu0
        %922 = vdwg.mxu0
        %v923 = vpack.c.bf16 %v918, %v918
        %v924 = vld [vmem:[#allocation19] sm:$0xf]
        %926 = vrot.lane.b32.xlu0 %v814, 120
        %v927 = vpop.permute.xlu0 %926
        %v929 = vunpack.c.l.b16 %v815
        %v930 = vpack.c.b16 %v929, %v929
        %931 = vrot.lane.b32.xlu0 %v930, 120
        %v932 = vpop.permute.xlu0 %931
        %v934 = vsel %vm817, %v927, 0
        %v937 = vsel %vm817, %v932, 0
        %939 = vmatprep.subr.bf16.mxu0 0
        %940 = vmatpush1.bf16.xpose.msra.mxu0 %v937
        %941 = vmatprep.subr.bf16.mxu0 0
        %942 = vmatpush1.bf16.xpose.msra.mxu0 0
        %943 = vmatprep.subr.bf16.mxu0 0
        %944 = vmatpush1.bf16.xpose.msra.mxu0 0
        %945 = vmatprep.subr.bf16.mxu0 0
        %946 = vmatpush1.bf16.xpose.msra.mxu0 0
        %947 = vmatprep.subr.bf16.mxu0 0
        %948 = vmatpush1.bf16.xpose.msra.mxu0 0
        %949 = vmatprep.subr.bf16.mxu0 0
        %950 = vmatpush1.bf16.xpose.msra.mxu0 0
        %951 = vmatprep.subr.bf16.mxu0 0
        %952 = vmatpush1.bf16.xpose.msra.mxu0 0
        %953 = vmatprep.subr.bf16.mxu0 0
        %954 = vmatpush1.bf16.xpose.msra.mxu0 0
        %955 = vmatprep.subr.bf16.mxu0 0
        %956 = vmatpush1.bf16.xpose.msra.mxu0 0
        %957 = vmatprep.subr.bf16.mxu0 0
        %958 = vmatpush1.bf16.xpose.msra.mxu0 0
        %959 = vmatprep.subr.bf16.mxu0 0
        %960 = vmatpush1.bf16.xpose.msra.mxu0 0
        %961 = vmatprep.subr.bf16.mxu0 0
        %962 = vmatpush1.bf16.xpose.msra.mxu0 0
        %963 = vmatprep.subr.bf16.mxu0 0
        %964 = vmatpush1.bf16.xpose.msra.mxu0 0
        %965 = vmatprep.subr.bf16.mxu0 0
        %966 = vmatpush1.bf16.xpose.msra.mxu0 0
        %967 = vmatprep.subr.bf16.mxu0 0
        %968 = vmatpush1.bf16.xpose.msra.mxu0 0
        %969 = vmatprep.subr.bf16.mxu0 0
        %970 = vmatpush1.bf16.xpose.msra.mxu0 0
        %971 = vmatprep.mubr.bf16.mxu0 0
        %972 = vmatmul.mubr.bf16.gmra.mrb[0].mxu0 %v934
        %v973 = vpop.f32.mrb[0].mxu0
        %v974 = vadd.f32 0.0, %v973
        %v975 = vpop.f32.mrb[0].mxu0
        %v976 = vpop.f32.mrb[0].mxu0
        %v977 = vpop.f32.mrb[0].mxu0
        %978 = vdwg.mxu0
        %v979 = vsel %vm817, %v974, -inf
        %980 = vmax.xlane.f32.xlu0 %v979
        %v981 = vpop.xlane.xlu0 %980
        %v982 = vsub.f32 %v974, %v981
        %v983 = vmul.f32 %v982, 1.442695
        %v984 = vpow.pop %v983
        %v985 = vsel %vm817, %v984, 0.0
        %986 = vadd.xlane.f32.xlu0 %v985
        %v987 = vpop.xlane.xlu0 %986
        %v988 = vrcp.pop %v987
        %v989 = vmul.f32 %v984, %v988
        %v990 = vpack.c.bf16 %v989, %v989
        %v992 = vunpack.c.l.b16 %v816
        %v993 = vpack.c.b16 %v992, %v992
        %994 = vrot.lane.b32.xlu0 %v993, 120
        %v995 = vpop.permute.xlu0 %994
        %v997 = vsel %vm817, %v990, 0
        %v1000 = vsel %vm879, %v995, 0
        %1002 = vmatprep.subr.bf16.mxu0 0
        %1003 = vmatpush1.bf16.msra.mxu0 %v1000
        %1004 = vmatprep.subr.bf16.mxu0 0
        %1005 = vmatpush1.bf16.msra.mxu0 0
        %1006 = vmatprep.subr.bf16.mxu0 0
        %1007 = vmatpush1.bf16.msra.mxu0 0
        %1008 = vmatprep.subr.bf16.mxu0 0
        %1009 = vmatpush1.bf16.msra.mxu0 0
        %1010 = vmatprep.subr.bf16.mxu0 0
        %1011 = vmatpush1.bf16.msra.mxu0 0
        %1012 = vmatprep.subr.bf16.mxu0 0
        %1013 = vmatpush1.bf16.msra.mxu0 0
        %1014 = vmatprep.subr.bf16.mxu0 0
        %1015 = vmatpush1.bf16.msra.mxu0 0
        %1016 = vmatprep.subr.bf16.mxu0 0
        %1017 = vmatpush1.bf16.msra.mxu0 0
        %1018 = vmatprep.subr.bf16.mxu0 0
        %1019 = vmatpush1.bf16.msra.mxu0 0
        %1020 = vmatprep.subr.bf16.mxu0 0
        %1021 = vmatpush1.bf16.msra.mxu0 0
        %1022 = vmatprep.subr.bf16.mxu0 0
        %1023 = vmatpush1.bf16.msra.mxu0 0
        %1024 = vmatprep.subr.bf16.mxu0 0
        %1025 = vmatpush1.bf16.msra.mxu0 0
        %1026 = vmatprep.subr.bf16.mxu0 0
        %1027 = vmatpush1.bf16.msra.mxu0 0
        %1028 = vmatprep.subr.bf16.mxu0 0
        %1029 = vmatpush1.bf16.msra.mxu0 0
        %1030 = vmatprep.subr.bf16.mxu0 0
        %1031 = vmatpush1.bf16.msra.mxu0 0
        %1032 = vmatprep.subr.bf16.mxu0 0
        %1033 = vmatpush1.bf16.msra.mxu0 0
        %1034 = vmatprep.mubr.bf16.mxu0 0
        %1035 = vmatmul.mubr.bf16.gmra.mrb[0].mxu0 %v997
        %v1036 = vpop.f32.mrb[0].mxu0
        %v1037 = vadd.f32 0.0, %v1036
        %v1038 = vpop.f32.mrb[0].mxu0
        %v1039 = vpop.f32.mrb[0].mxu0
        %v1040 = vpop.f32.mrb[0].mxu0
        %1041 = vdwg.mxu0
        %v1042 = vpack.c.bf16 %v1037, %v1037
        %s1043 = scalar_lea.vmem [#allocation19], 4
        %v1044 = vld [vmem:[%s1043] sm:$0xf]
        %v1046 = vsel %vm817, %v1042, 0
        %v1049 = vsel %vm879, %v1044, 0
        %1051 = vmatprep.subr.bf16.mxu0 0
        %1052 = vmatpush1.bf16.msra.mxu0 %v1049
        %1053 = vmatprep.subr.bf16.mxu0 0
        %1054 = vmatpush1.bf16.msra.mxu0 0
        %1055 = vmatprep.subr.bf16.mxu0 0
        %1056 = vmatpush1.bf16.msra.mxu0 0
        %1057 = vmatprep.subr.bf16.mxu0 0
        %1058 = vmatpush1.bf16.msra.mxu0 0
        %1059 = vmatprep.subr.bf16.mxu0 0
        %1060 = vmatpush1.bf16.msra.mxu0 0
        %1061 = vmatprep.subr.bf16.mxu0 0
        %1062 = vmatpush1.bf16.msra.mxu0 0
        %1063 = vmatprep.subr.bf16.mxu0 0
        %1064 = vmatpush1.bf16.msra.mxu0 0
        %1065 = vmatprep.subr.bf16.mxu0 0
        %1066 = vmatpush1.bf16.msra.mxu0 0
        %1067 = vmatprep.subr.bf16.mxu0 0
        %1068 = vmatpush1.bf16.msra.mxu0 0
        %1069 = vmatprep.subr.bf16.mxu0 0
        %1070 = vmatpush1.bf16.msra.mxu0 0
        %1071 = vmatprep.subr.bf16.mxu0 0
        %1072 = vmatpush1.bf16.msra.mxu0 0
        %1073 = vmatprep.subr.bf16.mxu0 0
        %1074 = vmatpush1.bf16.msra.mxu0 0
        %1075 = vmatprep.subr.bf16.mxu0 0
        %1076 = vmatpush1.bf16.msra.mxu0 0
        %1077 = vmatprep.subr.bf16.mxu0 0
        %1078 = vmatpush1.bf16.msra.mxu0 0
        %1079 = vmatprep.subr.bf16.mxu0 0
        %1080 = vmatpush1.bf16.msra.mxu0 0
        %1081 = vmatprep.subr.bf16.mxu0 0
        %1082 = vmatpush1.bf16.msra.mxu0 0
        %1083 = vmatprep.mubr.bf16.mxu0 0
        %1084 = vmatmul.mubr.bf16.gmra.mrb[0].mxu0 %v1046
        %v1085 = vpop.f32.mrb[0].mxu0
        %v1086 = vadd.f32 0.0, %v1085
        %v1087 = vpop.f32.mrb[0].mxu0
        %v1088 = vpop.f32.mrb[0].mxu0
        %v1089 = vpop.f32.mrb[0].mxu0
        %1090 = vdwg.mxu0
        %v1092 = vsel %vm817, %v923, 0
        %v1095 = vsel %vm879, %v924, 0
        %1097 = vmatprep.subr.bf16.mxu0 0
        %1098 = vmatpush1.bf16.msra.mxu0 %v1095
        %1099 = vmatprep.subr.bf16.mxu0 0
        %1100 = vmatpush1.bf16.msra.mxu0 0
        %1101 = vmatprep.subr.bf16.mxu0 0
        %1102 = vmatpush1.bf16.msra.mxu0 0
        %1103 = vmatprep.subr.bf16.mxu0 0
        %1104 = vmatpush1.bf16.msra.mxu0 0
        %1105 = vmatprep.subr.bf16.mxu0 0
        %1106 = vmatpush1.bf16.msra.mxu0 0
        %1107 = vmatprep.subr.bf16.mxu0 0
        %1108 = vmatpush1.bf16.msra.mxu0 0
        %1109 = vmatprep.subr.bf16.mxu0 0
        %1110 = vmatpush1.bf16.msra.mxu0 0
        %1111 = vmatprep.subr.bf16.mxu0 0
        %1112 = vmatpush1.bf16.msra.mxu0 0
        %1113 = vmatprep.subr.bf16.mxu0 0
        %1114 = vmatpush1.bf16.msra.mxu0 0
        %1115 = vmatprep.subr.bf16.mxu0 0
        %1116 = vmatpush1.bf16.msra.mxu0 0
        %1117 = vmatprep.subr.bf16.mxu0 0
        %1118 = vmatpush1.bf16.msra.mxu0 0
        %1119 = vmatprep.subr.bf16.mxu0 0
        %1120 = vmatpush1.bf16.msra.mxu0 0
        %1121 = vmatprep.subr.bf16.mxu0 0
        %1122 = vmatpush1.bf16.msra.mxu0 0
        %1123 = vmatprep.subr.bf16.mxu0 0
        %1124 = vmatpush1.bf16.msra.mxu0 0
        %1125 = vmatprep.subr.bf16.mxu0 0
        %1126 = vmatpush1.bf16.msra.mxu0 0
        %1127 = vmatprep.subr.bf16.mxu0 0
        %1128 = vmatpush1.bf16.msra.mxu0 0
        %1129 = vmatprep.mubr.bf16.mxu0 0
        %1130 = vmatmul.mubr.bf16.gmra.mrb[0].mxu0 %v1092
        %v1131 = vpop.f32.mrb[0].mxu0
        %v1132 = vadd.f32 %v1086, %v1131
        %v1133 = vpop.f32.mrb[0].mxu0
        %v1134 = vpop.f32.mrb[0].mxu0
        %v1135 = vpop.f32.mrb[0].mxu0
        %1136 = vdwg.mxu0
        %1137 = vrot.lane.b32.xlu0 %v814, 112
        %v1138 = vpop.permute.xlu0 %1137
        %1139 = vrot.lane.b32.xlu0 %v930, 112
        %v1140 = vpop.permute.xlu0 %1139
        %v1142 = vsel %vm817, %v1138, 0
        %v1145 = vsel %vm817, %v1140, 0
        %1147 = vmatprep.subr.bf16.mxu0 0
        %1148 = vmatpush1.bf16.xpose.msra.mxu0 %v1145
        %1149 = vmatprep.subr.bf16.mxu0 0
        %1150 = vmatpush1.bf16.xpose.msra.mxu0 0
        %1151 = vmatprep.subr.bf16.mxu0 0
        %1152 = vmatpush1.bf16.xpose.msra.mxu0 0
        %1153 = vmatprep.subr.bf16.mxu0 0
        %1154 = vmatpush1.bf16.xpose.msra.mxu0 0
        %1155 = vmatprep.subr.bf16.mxu0 0
        %1156 = vmatpush1.bf16.xpose.msra.mxu0 0
        %1157 = vmatprep.subr.bf16.mxu0 0
        %1158 = vmatpush1.bf16.xpose.msra.mxu0 0
        %1159 = vmatprep.subr.bf16.mxu0 0
        %1160 = vmatpush1.bf16.xpose.msra.mxu0 0
        %1161 = vmatprep.subr.bf16.mxu0 0
        %1162 = vmatpush1.bf16.xpose.msra.mxu0 0
        %1163 = vmatprep.subr.bf16.mxu0 0
        %1164 = vmatpush1.bf16.xpose.msra.mxu0 0
        %1165 = vmatprep.subr.bf16.mxu0 0
        %1166 = vmatpush1.bf16.xpose.msra.mxu0 0
        %1167 = vmatprep.subr.bf16.mxu0 0
        %1168 = vmatpush1.bf16.xpose.msra.mxu0 0
        %1169 = vmatprep.subr.bf16.mxu0 0
        %1170 = vmatpush1.bf16.xpose.msra.mxu0 0
        %1171 = vmatprep.subr.bf16.mxu0 0
        %1172 = vmatpush1.bf16.xpose.msra.mxu0 0
        %1173 = vmatprep.subr.bf16.mxu0 0
        %1174 = vmatpush1.bf16.xpose.msra.mxu0 0
        %1175 = vmatprep.subr.bf16.mxu0 0
        %1176 = vmatpush1.bf16.xpose.msra.mxu0 0
        %1177 = vmatprep.subr.bf16.mxu0 0
        %1178 = vmatpush1.bf16.xpose.msra.mxu0 0
        %1179 = vmatprep.mubr.bf16.mxu0 0
        %1180 = vmatmul.mubr.bf16.gmra.mrb[0].mxu0 %v1142
        %v1181 = vpop.f32.mrb[0].mxu0
        %v1182 = vadd.f32 0.0, %v1181
        %v1183 = vpop.f32.mrb[0].mxu0
        %v1184 = vpop.f32.mrb[0].mxu0
        %v1185 = vpop.f32.mrb[0].mxu0
        %1186 = vdwg.mxu0
        %v1187 = vsel %vm817, %v1182, -inf
        %1188 = vmax.xlane.f32.xlu0 %v1187
        %v1189 = vpop.xlane.xlu0 %1188
        %v1190 = vsub.f32 %v1182, %v1189
        %v1191 = vmul.f32 %v1190, 1.442695
        %v1192 = vpow.pop %v1191
        %v1193 = vsel %vm817, %v1192, 0.0
        %1194 = vadd.xlane.f32.xlu0 %v1193
        %v1195 = vpop.xlane.xlu0 %1194
        %v1196 = vrcp.pop %v1195
        %v1197 = vmul.f32 %v1192, %v1196
        %v1198 = vpack.c.bf16 %v1197, %v1197
        %1199 = vrot.lane.b32.xlu0 %v993, 112
        %v1200 = vpop.permute.xlu0 %1199
        %v1202 = vsel %vm817, %v1198, 0
        %v1205 = vsel %vm879, %v1200, 0
        %1207 = vmatprep.subr.bf16.mxu0 0
        %1208 = vmatpush1.bf16.msra.mxu0 %v1205
        %1209 = vmatprep.subr.bf16.mxu0 0
        %1210 = vmatpush1.bf16.msra.mxu0 0
        %1211 = vmatprep.subr.bf16.mxu0 0
        %1212 = vmatpush1.bf16.msra.mxu0 0
        %1213 = vmatprep.subr.bf16.mxu0 0
        %1214 = vmatpush1.bf16.msra.mxu0 0
        %1215 = vmatprep.subr.bf16.mxu0 0
        %1216 = vmatpush1.bf16.msra.mxu0 0
        %1217 = vmatprep.subr.bf16.mxu0 0
        %1218 = vmatpush1.bf16.msra.mxu0 0
        %1219 = vmatprep.subr.bf16.mxu0 0
        %1220 = vmatpush1.bf16.msra.mxu0 0
        %1221 = vmatprep.subr.bf16.mxu0 0
        %1222 = vmatpush1.bf16.msra.mxu0 0
        %1223 = vmatprep.subr.bf16.mxu0 0
        %1224 = vmatpush1.bf16.msra.mxu0 0
        %1225 = vmatprep.subr.bf16.mxu0 0
        %1226 = vmatpush1.bf16.msra.mxu0 0
        %1227 = vmatprep.subr.bf16.mxu0 0
        %1228 = vmatpush1.bf16.msra.mxu0 0
        %1229 = vmatprep.subr.bf16.mxu0 0
        %1230 = vmatpush1.bf16.msra.mxu0 0
        %1231 = vmatprep.subr.bf16.mxu0 0
        %1232 = vmatpush1.bf16.msra.mxu0 0
        %1233 = vmatprep.subr.bf16.mxu0 0
        %1234 = vmatpush1.bf16.msra.mxu0 0
        %1235 = vmatprep.subr.bf16.mxu0 0
        %1236 = vmatpush1.bf16.msra.mxu0 0
        %1237 = vmatprep.subr.bf16.mxu0 0
        %1238 = vmatpush1.bf16.msra.mxu0 0
        %1239 = vmatprep.mubr.bf16.mxu0 0
        %1240 = vmatmul.mubr.bf16.gmra.mrb[0].mxu0 %v1202
        %v1241 = vpop.f32.mrb[0].mxu0
        %v1242 = vadd.f32 0.0, %v1241
        %v1243 = vpop.f32.mrb[0].mxu0
        %v1244 = vpop.f32.mrb[0].mxu0
        %v1245 = vpop.f32.mrb[0].mxu0
        %1246 = vdwg.mxu0
        %v1247 = vpack.c.bf16 %v1242, %v1242
        %s1248 = scalar_lea.vmem [#allocation19], 8
        %v1249 = vld [vmem:[%s1248] sm:$0xf]
        %v1251 = vsel %vm817, %v1247, 0
        %v1254 = vsel %vm879, %v1249, 0
        %1256 = vmatprep.subr.bf16.mxu0 0
        %1257 = vmatpush1.bf16.msra.mxu0 %v1254
        %1258 = vmatprep.subr.bf16.mxu0 0
        %1259 = vmatpush1.bf16.msra.mxu0 0
        %1260 = vmatprep.subr.bf16.mxu0 0
        %1261 = vmatpush1.bf16.msra.mxu0 0
        %1262 = vmatprep.subr.bf16.mxu0 0
        %1263 = vmatpush1.bf16.msra.mxu0 0
        %1264 = vmatprep.subr.bf16.mxu0 0
        %1265 = vmatpush1.bf16.msra.mxu0 0
        %1266 = vmatprep.subr.bf16.mxu0 0
        %1267 = vmatpush1.bf16.msra.mxu0 0
        %1268 = vmatprep.subr.bf16.mxu0 0
        %1269 = vmatpush1.bf16.msra.mxu0 0
        %1270 = vmatprep.subr.bf16.mxu0 0
        %1271 = vmatpush1.bf16.msra.mxu0 0
        %1272 = vmatprep.subr.bf16.mxu0 0
        %1273 = vmatpush1.bf16.msra.mxu0 0
        %1274 = vmatprep.subr.bf16.mxu0 0
        %1275 = vmatpush1.bf16.msra.mxu0 0
        %1276 = vmatprep.subr.bf16.mxu0 0
        %1277 = vmatpush1.bf16.msra.mxu0 0
        %1278 = vmatprep.subr.bf16.mxu0 0
        %1279 = vmatpush1.bf16.msra.mxu0 0
        %1280 = vmatprep.subr.bf16.mxu0 0
        %1281 = vmatpush1.bf16.msra.mxu0 0
        %1282 = vmatprep.subr.bf16.mxu0 0
        %1283 = vmatpush1.bf16.msra.mxu0 0
        %1284 = vmatprep.subr.bf16.mxu0 0
        %1285 = vmatpush1.bf16.msra.mxu0 0
        %1286 = vmatprep.subr.bf16.mxu0 0
        %1287 = vmatpush1.bf16.msra.mxu0 0
        %1288 = vmatprep.mubr.bf16.mxu0 0
        %1289 = vmatmul.mubr.bf16.gmra.mrb[0].mxu0 %v1251
        %v1290 = vpop.f32.mrb[0].mxu0
        %v1291 = vadd.f32 0.0, %v1290
        %v1292 = vpop.f32.mrb[0].mxu0
        %v1293 = vpop.f32.mrb[0].mxu0
        %v1294 = vpop.f32.mrb[0].mxu0
        %1295 = vdwg.mxu0
        %v1296 = vadd.f32 %v1132, %v1291
        %1297 = vrot.lane.b32.xlu0 %v814, 104
        %v1298 = vpop.permute.xlu0 %1297
        %1299 = vrot.lane.b32.xlu0 %v930, 104
        %v1300 = vpop.permute.xlu0 %1299
        %v1302 = vsel %vm817, %v1298, 0
        %v1305 = vsel %vm817, %v1300, 0
        %1307 = vmatprep.subr.bf16.mxu0 0
        %1308 = vmatpush1.bf16.xpose.msra.mxu0 %v1305
        %1309 = vmatprep.subr.bf16.mxu0 0
        %1310 = vmatpush1.bf16.xpose.msra.mxu0 0
        %1311 = vmatprep.subr.bf16.mxu0 0
        %1312 = vmatpush1.bf16.xpose.msra.mxu0 0
        %1313 = vmatprep.subr.bf16.mxu0 0
        %1314 = vmatpush1.bf16.xpose.msra.mxu0 0
        %1315 = vmatprep.subr.bf16.mxu0 0
        %1316 = vmatpush1.bf16.xpose.msra.mxu0 0
        %1317 = vmatprep.subr.bf16.mxu0 0
        %1318 = vmatpush1.bf16.xpose.msra.mxu0 0
        %1319 = vmatprep.subr.bf16.mxu0 0
        %1320 = vmatpush1.bf16.xpose.msra.mxu0 0
        %1321 = vmatprep.subr.bf16.mxu0 0
        %1322 = vmatpush1.bf16.xpose.msra.mxu0 0
        %1323 = vmatprep.subr.bf16.mxu0 0
        %1324 = vmatpush1.bf16.xpose.msra.mxu0 0
        %1325 = vmatprep.subr.bf16.mxu0 0
        %1326 = vmatpush1.bf16.xpose.msra.mxu0 0
        %1327 = vmatprep.subr.bf16.mxu0 0
        %1328 = vmatpush1.bf16.xpose.msra.mxu0 0
        %1329 = vmatprep.subr.bf16.mxu0 0
        %1330 = vmatpush1.bf16.xpose.msra.mxu0 0
        %1331 = vmatprep.subr.bf16.mxu0 0
        %1332 = vmatpush1.bf16.xpose.msra.mxu0 0
        %1333 = vmatprep.subr.bf16.mxu0 0
        %1334 = vmatpush1.bf16.xpose.msra.mxu0 0
        %1335 = vmatprep.subr.bf16.mxu0 0
        %1336 = vmatpush1.bf16.xpose.msra.mxu0 0
        %1337 = vmatprep.subr.bf16.mxu0 0
        %1338 = vmatpush1.bf16.xpose.msra.mxu0 0
        %1339 = vmatprep.mubr.bf16.mxu0 0
        %1340 = vmatmul.mubr.bf16.gmra.mrb[0].mxu0 %v1302
        %v1341 = vpop.f32.mrb[0].mxu0
        %v1342 = vadd.f32 0.0, %v1341
        %v1343 = vpop.f32.mrb[0].mxu0
        %v1344 = vpop.f32.mrb[0].mxu0
        %v1345 = vpop.f32.mrb[0].mxu0
        %1346 = vdwg.mxu0
        %v1347 = vsel %vm817, %v1342, -inf
        %1348 = vmax.xlane.f32.xlu0 %v1347
        %v1349 = vpop.xlane.xlu0 %1348
        %v1350 = vsub.f32 %v1342, %v1349
        %v1351 = vmul.f32 %v1350, 1.442695
        %v1352 = vpow.pop %v1351
        %v1353 = vsel %vm817, %v1352, 0.0
        %1354 = vadd.xlane.f32.xlu0 %v1353
        %v1355 = vpop.xlane.xlu0 %1354
        %v1356 = vrcp.pop %v1355
        %v1357 = vmul.f32 %v1352, %v1356
        %v1358 = vpack.c.bf16 %v1357, %v1357
        %1359 = vrot.lane.b32.xlu0 %v993, 104
        %v1360 = vpop.permute.xlu0 %1359
        %v1362 = vsel %vm817, %v1358, 0
        %v1365 = vsel %vm879, %v1360, 0
        %1367 = vmatprep.subr.bf16.mxu0 0
        %1368 = vmatpush1.bf16.msra.mxu0 %v1365
        %1369 = vmatprep.subr.bf16.mxu0 0
        %1370 = vmatpush1.bf16.msra.mxu0 0
        %1371 = vmatprep.subr.bf16.mxu0 0
        %1372 = vmatpush1.bf16.msra.mxu0 0
        %1373 = vmatprep.subr.bf16.mxu0 0
        %1374 = vmatpush1.bf16.msra.mxu0 0
        %1375 = vmatprep.subr.bf16.mxu0 0
        %1376 = vmatpush1.bf16.msra.mxu0 0
        %1377 = vmatprep.subr.bf16.mxu0 0
        %1378 = vmatpush1.bf16.msra.mxu0 0
        %1379 = vmatprep.subr.bf16.mxu0 0
        %1380 = vmatpush1.bf16.msra.mxu0 0
        %1381 = vmatprep.subr.bf16.mxu0 0
        %1382 = vmatpush1.bf16.msra.mxu0 0
        %1383 = vmatprep.subr.bf16.mxu0 0
        %1384 = vmatpush1.bf16.msra.mxu0 0
        %1385 = vmatprep.subr.bf16.mxu0 0
        %1386 = vmatpush1.bf16.msra.mxu0 0
        %1387 = vmatprep.subr.bf16.mxu0 0
        %1388 = vmatpush1.bf16.msra.mxu0 0
        %1389 = vmatprep.subr.bf16.mxu0 0
        %1390 = vmatpush1.bf16.msra.mxu0 0
        %1391 = vmatprep.subr.bf16.mxu0 0
        %1392 = vmatpush1.bf16.msra.mxu0 0
        %1393 = vmatprep.subr.bf16.mxu0 0
        %1394 = vmatpush1.bf16.msra.mxu0 0
        %1395 = vmatprep.subr.bf16.mxu0 0
        %1396 = vmatpush1.bf16.msra.mxu0 0
        %1397 = vmatprep.subr.bf16.mxu0 0
        %1398 = vmatpush1.bf16.msra.mxu0 0
        %1399 = vmatprep.mubr.bf16.mxu0 0
        %1400 = vmatmul.mubr.bf16.gmra.mrb[0].mxu0 %v1362
        %v1401 = vpop.f32.mrb[0].mxu0
        %v1402 = vadd.f32 0.0, %v1401
        %v1403 = vpop.f32.mrb[0].mxu0
        %v1404 = vpop.f32.mrb[0].mxu0
        %v1405 = vpop.f32.mrb[0].mxu0
        %1406 = vdwg.mxu0
        %v1407 = vpack.c.bf16 %v1402, %v1402
        %s1408 = scalar_lea.vmem [#allocation19], 12
        %v1409 = vld [vmem:[%s1408] sm:$0xf]
        %v1411 = vsel %vm817, %v1407, 0
        %v1414 = vsel %vm879, %v1409, 0
        %1416 = vmatprep.subr.bf16.mxu0 0
        %1417 = vmatpush1.bf16.msra.mxu0 %v1414
        %1418 = vmatprep.subr.bf16.mxu0 0
        %1419 = vmatpush1.bf16.msra.mxu0 0
        %1420 = vmatprep.subr.bf16.mxu0 0
        %1421 = vmatpush1.bf16.msra.mxu0 0
        %1422 = vmatprep.subr.bf16.mxu0 0
        %1423 = vmatpush1.bf16.msra.mxu0 0
        %1424 = vmatprep.subr.bf16.mxu0 0
        %1425 = vmatpush1.bf16.msra.mxu0 0
        %1426 = vmatprep.subr.bf16.mxu0 0
        %1427 = vmatpush1.bf16.msra.mxu0 0
        %1428 = vmatprep.subr.bf16.mxu0 0
        %1429 = vmatpush1.bf16.msra.mxu0 0
        %1430 = vmatprep.subr.bf16.mxu0 0
        %1431 = vmatpush1.bf16.msra.mxu0 0
        %1432 = vmatprep.subr.bf16.mxu0 0
        %1433 = vmatpush1.bf16.msra.mxu0 0
        %1434 = vmatprep.subr.bf16.mxu0 0
        %1435 = vmatpush1.bf16.msra.mxu0 0
        %1436 = vmatprep.subr.bf16.mxu0 0
        %1437 = vmatpush1.bf16.msra.mxu0 0
        %1438 = vmatprep.subr.bf16.mxu0 0
        %1439 = vmatpush1.bf16.msra.mxu0 0
        %1440 = vmatprep.subr.bf16.mxu0 0
        %1441 = vmatpush1.bf16.msra.mxu0 0
        %1442 = vmatprep.subr.bf16.mxu0 0
        %1443 = vmatpush1.bf16.msra.mxu0 0
        %1444 = vmatprep.subr.bf16.mxu0 0
        %1445 = vmatpush1.bf16.msra.mxu0 0
        %1446 = vmatprep.subr.bf16.mxu0 0
        %1447 = vmatpush1.bf16.msra.mxu0 0
        %1448 = vmatprep.mubr.bf16.mxu0 0
        %1449 = vmatmul.mubr.bf16.gmra.mrb[0].mxu0 %v1411
        %v1450 = vpop.f32.mrb[0].mxu0
        %v1451 = vadd.f32 0.0, %v1450
        %v1452 = vpop.f32.mrb[0].mxu0
        %v1453 = vpop.f32.mrb[0].mxu0
        %v1454 = vpop.f32.mrb[0].mxu0
        %1455 = vdwg.mxu0
        %v1456 = vadd.f32 %v1296, %v1451
        %v1457 = vld [vmem:[#allocation21] sm:$0x1]
        %v1459 = vlaneseq
        %v1460 = vshrl.u32 %v1459, 7
        %v1461 = vsub.s32 0, %v1460
        %v1462 = vrot.slane %v1457, %v1461
        %v1464 = vadd.f32 %v1456, %v1462
        %1465 = vst.msk [vmem:[%s597] sm:$0xff] %vm770, %v1464
        %s1466 = sand.u32 %s305, 1
        %s1467 = scalar_lea.sflag [#allocation6], %s1466
        %s1468 = sand.u32 %s305, 1
        %s1469 = smul.addr %s1468, 8
        %s1470 = scalar_lea.vmem [#allocation22], %s1469
        // Predicated region
        $region113: #{tpu_custom_call.1} parent=63 // pred_check
          %p1471 = pneg %p315
        $region114: #{tpu_custom_call.1} parent=63 // pred_check_branch
          %1473 = sbr.rel (%p1471) target = $region116
        $region115: #{tpu_custom_call.1} parent=63 // pred_region
          %s1475 = ssub.s32 128, 128
          %1476 = vsyncadd %s1467, %s1475
          %s1477 = sadd.s32 %s40, %s39
          %s1478 = smul.addr %s1477, 128
          %s1479 = scalar_lea.hbm %s11, %s1478
          %s1481 = sshll.u32 %s1470, 4
          %s1482 = int_to_ptr.vmem [resolvable:$true] %s1481
          %1484 = dma.vmem_to_hbm [thread:$0]  %s1482, 128, %s1479, %s1467
        $region116: #{tpu_custom_call.1} parent=63 // pred_fallthru
          _
      $region64: #{tpu_custom_call.1} parent=5 // pred_fallthru
        _
      %p1485 = scmp.le.s32.totalorder 2, %s30
      // Predicated region
      $region117: #{tpu_custom_call.1} parent=5 // pred_check
        %p1486 = pneg %p1485
      $region118: #{tpu_custom_call.1} parent=5 // pred_check_branch
        %1488 = sbr.rel (%p1486) target = $region120
      $region119: #{tpu_custom_call.1} parent=5 // pred_region
        %s1489 = ssub.s32 %s30, 2
        // Predicated region
        $region121: #{tpu_custom_call.1} parent=119 // pred_check
          %p1490 = pneg %p321
        $region122: #{tpu_custom_call.1} parent=119 // pred_check_branch
          %1492 = sbr.rel (%p1490) target = $region124
        $region123: #{tpu_custom_call.1} parent=119 // pred_region
          %s1493 = sand.u32 %s306, 1
          %s1494 = scalar_lea.sflag [#allocation6], %s1493
          %s1495 = sand.u32 %s306, 1
          %s1496 = smul.addr %s1495, 8
          %s1497 = scalar_lea.vmem [#allocation22], %s1496
          %1498 = dma.done %s1494, 128
        $region124: #{tpu_custom_call.1} parent=119 // pred_fallthru
          _
      $region120: #{tpu_custom_call.1} parent=5 // pred_fallthru
        _
    $region6: #{tpu_custom_call.1} parent=1 // loop_footer
      %s34 = sadd.s32 1, %s30
    $region7: #{tpu_custom_call.1} parent=1 // loop_footer_branch
      %29 = sbr.rel target = $region3
    $region8: #{tpu_custom_call.1} parent=1 // loop_exit
      _
    %1499 = vsyncpa [#allocation5], 1
    %s1500 = scalar_lea.sflag [#allocation5], 1
    %1501 = vsyncpa %s1500, 1
    %1502 = vsyncpa [#allocation8], 1
    %s1503 = scalar_lea.sflag [#allocation8], 1
    %1504 = vsyncpa %s1503, 1
    %1505 = vsyncpa [#allocation11], 1
    %1506 = vsyncpa [#allocation14], 1
    %1507 = vsyncpa [#allocation17], 1
    %1508 = vsyncpa [#allocation20], 1
    %1509 = vsyncpa [#allocation6], 1
    %s1510 = scalar_lea.sflag [#allocation6], 1
    %1511 = vsyncpa %s1510, 1

</llo_original>
